<compile_context>
chip_gen: v7x
topology: tpu7x:2x2x1
jax: 0.10.0
libtpu: 0.0.40
codegen_flags: <defaults>
</compile_context>

<pallas_src>
import jax
import jax.numpy as jnp
from jax import lax
from jax.experimental import pallas as pl
from jax.experimental.pallas import tpu as pltpu
import numpy as np


def gru_fc_kernel(ids_ref, gi_tab_ref, whh_ref, bhn_ref, wfc_ref, bfc_ref,
                  out_ref, gi_scratch):
    """In-kernel embedding gather + fused-gate GRU recurrence + FC on last h.

    ids_ref    : (T*B, 1) int32  time-major token ids (batch padded to 8)
    gi_tab_ref : (V, 3H)  f32    fused input activations per token:
                                 gi[v] = emb[v] @ W_ih^T + b_ih, with b_hr/b_hz
                                 already folded into the r/z columns
    whh_ref    : (H, 3H)  f32    W_hh^T, all three gates fused along lanes (r|z|n)
    bhn_ref    : (1, H)   f32    hidden bias of the n gate (stays inside r*(.))
    wfc_ref    : (H, Opad) f32   fc weight transposed, lane-padded to 128
    bfc_ref    : (1, Opad) f32   fc bias, lane-padded
    out_ref    : (B, Opad) f32   lane-dense output tile
    gi_scratch : (T*B, 3H) f32   VMEM scratch for the gathered gate activations
    """
    TB = ids_ref.shape[0]
    H = whh_ref.shape[0]
    B = out_ref.shape[0]
    T = TB // B
    V = gi_tab_ref.shape[0]

    # ---- Embedding gather as a one-hot matmul (MXU is otherwise idle here) ----
    ids = ids_ref[...]                                             # (T*B, 1)
    iota = lax.broadcasted_iota(jnp.int32, (TB, V), 1)             # (T*B, V)
    onehot = (ids == iota).astype(jnp.float32)                     # (T*B, V)
    gi_scratch[...] = jnp.dot(onehot, gi_tab_ref[...],
                              preferred_element_type=jnp.float32)  # (T*B, 3H)

    # ---- Loop invariants hoisted out of the recurrence ----
    whh = whh_ref[...]                                             # (H, 3H)
    bhn = jnp.broadcast_to(bhn_ref[...], (B, H))                   # once, hoisted

    def step(t, h):
        off = pl.multiple_of(t * B, B)
        gi_t = gi_scratch[pl.ds(off, B), :]                        # (B, 3H)
        # Single fused MXU pass for all three gates (was 3 small matmuls).
        hg = jnp.dot(h, whh, preferred_element_type=jnp.float32)   # (B, 3H)
        # Single sigmoid EUP pass over the concatenated r|z half.
        rz = jax.nn.sigmoid(gi_t[:, :2 * H] + hg[:, :2 * H])
        r = rz[:, :H]
        z = rz[:, H:2 * H]
        # b_in folded into gi; b_hn must stay inside r*(.) (PyTorch GRU).
        n = jnp.tanh(gi_t[:, 2 * H:] + r * (hg[:, 2 * H:] + bhn))
        return (1.0 - z) * n + z * h

    # T is small & static -> full unroll; cap the unroll (e.g. 8) for large T.
    h0 = jnp.zeros((B, H), jnp.float32)
    h_last = lax.fori_loop(0, T, step, h0, unroll=True)

    # Lane-dense (B, Opad) store; wrapper slices the valid (B, O) corner.
    out_ref[...] = (jnp.dot(h_last, wfc_ref[...],
                            preferred_element_type=jnp.float32)
                    + bfc_ref[...])


def make_params(input_size, hidden_size, output_size, seed=0):
    """Deterministic parameter init (shapes match the PyTorch module)."""
    k = jax.random.PRNGKey(seed)
    ks = jax.random.split(k, 8)
    bound = 1.0 / np.sqrt(hidden_size)
    u = lambda key, shape, b: jax.random.uniform(
        key, shape, jnp.float32, minval=-b, maxval=b)
    return {
        "embedding": jax.random.normal(ks[0], (input_size, hidden_size),
                                       jnp.float32),
        # PyTorch GRU weights: (3H, H) with gate order (r, z, n)
        "w_ih": u(ks[1], (3 * hidden_size, hidden_size), bound),
        "w_hh": u(ks[2], (3 * hidden_size, hidden_size), bound),
        "b_ih": u(ks[3], (3 * hidden_size,), bound),
        "b_hh": u(ks[4], (3 * hidden_size,), bound),
        # PyTorch Linear: (O, H), (O,)
        "w_fc": u(ks[5], (output_size, hidden_size), bound),
        "b_fc": u(ks[6], (output_size,), bound),
    }


def prepare_kernel_params(params):
    """One-time repack of PyTorch-layout params into kernel layout.

    Folds emb @ W_ih^T + b_ih (and the commuting b_hr/b_hz hidden biases) into
    one fused (V, 3H) lookup table, keeps W_hh^T as a single fused (H, 3H) RHS,
    and lane-pads the fc weight/bias to a multiple of 128.
    """
    emb = params["embedding"]                      # (V, H)
    H = emb.shape[1]
    w_ih, w_hh = params["w_ih"], params["w_hh"]    # (3H, H), gate order r,z,n
    b_ih, b_hh = params["b_ih"], params["b_hh"]    # (3H,)
    w_fc, b_fc = params["w_fc"], params["b_fc"]    # (O, H), (O,)
    O = int(w_fc.shape[0])
    O_pad = ((O + 127) // 128) * 128

    gi = emb @ w_ih.T + b_ih                       # (V, 3H): x_t@W_ih^T == gi[id]
    gi_tab = jnp.concatenate(
        [gi[:, :2 * H] + b_hh[:2 * H],             # b_hr, b_hz commute into the sum
         gi[:, 2 * H:]], axis=1)                   # b_hn must stay inside r*(.)

    w_hh_cat = w_hh.T                              # (H, 3H) = [Whr^T | Whz^T | Whn^T]
    b_hn = b_hh[2 * H:3 * H].reshape(1, H)

    w_fc_t = jnp.pad(w_fc.T, ((0, 0), (0, O_pad - O)))           # (H, O_pad)
    b_fc_p = jnp.pad(b_fc, (0, O_pad - O)).reshape(1, O_pad)     # (1, O_pad)

    return {"gi_tab": gi_tab, "w_hh_cat": w_hh_cat, "b_hn": b_hn,
            "w_fc_t": w_fc_t, "b_fc_p": b_fc_p, "output_size": O}


def nomenclature_forward(x_ids, kparams):
    """x_ids: (B, T) int token ids. Returns (B, output_size) float32."""
    whh = kparams["w_hh_cat"]
    H = whh.shape[0]
    O = kparams["output_size"]
    O_pad = kparams["w_fc_t"].shape[1]
    B, T = x_ids.shape
    B_pad = ((B + 7) // 8) * 8                     # f32 sublane alignment

    # Only the tiny id tensor is reshaped on the wrapper side; everything else
    # (gather, recurrence, projection) happens inside the kernel.
    ids_tm = jnp.transpose(x_ids.astype(jnp.int32))            # (T, B)
    ids_tm = jnp.pad(ids_tm, ((0, 0), (0, B_pad - B)))          # (T, B_pad)
    ids_col = ids_tm.reshape(T * B_pad, 1)                      # (T*B_pad, 1)

    # Everything fits comfortably in VMEM at these sizes; no grid needed.
    # At scale: batch grid axis ("parallel") for v7x's 2 TCs, stream gi over a
    # trailing T axis / pl.Buffered specs, and set vmem_limit_bytes explicitly.
    vmem = pl.BlockSpec(memory_space=pltpu.MemorySpace.VMEM)
    out = pl.pallas_call(
        gru_fc_kernel,
        out_shape=jax.ShapeDtypeStruct((B_pad, O_pad), jnp.float32),
        in_specs=[vmem] * 6,
        out_specs=vmem,
        scratch_shapes=[pltpu.VMEM((T * B_pad, 3 * H), jnp.float32)],
    )(ids_col, kparams["gi_tab"], whh, kparams["b_hn"],
      kparams["w_fc_t"], kparams["b_fc_p"])
    return out[:B, :O]


def reference_forward(x_ids, params):
    """Pure-JAX reference replicating PyTorch GRU semantics (unfolded weights)."""
    emb = params["embedding"]
    H = emb.shape[1]
    x = jnp.take(emb, x_ids, axis=0)               # (B, T, H)
    B, T, _ = x.shape
    wih_t, whh_t = params["w_ih"].T, params["w_hh"].T
    bih, bhh = params["b_ih"], params["b_hh"]

    def step(h, x_t):
        gi = x_t @ wih_t + bih
        gh = h @ whh_t + bhh
        r = jax.nn.sigmoid(gi[:, :H] + gh[:, :H])
        z = jax.nn.sigmoid(gi[:, H:2 * H] + gh[:, H:2 * H])
        n = jnp.tanh(gi[:, 2 * H:] + r * gh[:, 2 * H:])
        h_new = (1.0 - z) * n + z * h
        return h_new, None

    h0 = jnp.zeros((B, H), jnp.float32)
    h_last, _ = lax.scan(step, h0, jnp.transpose(x, (1, 0, 2)))
    return h_last @ params["w_fc"].T + params["b_fc"]


if __name__ == "__main__":
    input_size = 16     # vocab
    hidden_size = 32
    output_size = 8
    batch, seq = 2, 8

    key = jax.random.PRNGKey(0)
    x_ids = jax.random.randint(key, (batch, seq), 0, input_size, dtype=jnp.int32)
    params = make_params(input_size, hidden_size, output_size, seed=0)
    kparams = prepare_kernel_params(params)     # one-time weight repack

    out = nomenclature_forward(x_ids, kparams)
    out = jax.block_until_ready(out)

    ref = reference_forward(x_ids, params)
    np.testing.assert_allclose(np.asarray(out), np.asarray(ref),
                               rtol=1e-4, atol=1e-4)
    print("KERNEL_OK")
</pallas_src>

<mosaic_0001>
module attributes {stable_mosaic.version = 11 : i64} {
  func.func @gru_fc_kernel(%arg0: memref<64x1xi32, #tpu.memory_space<vmem>>, %arg1: memref<16x96xf32, #tpu.memory_space<vmem>>, %arg2: memref<32x96xf32, #tpu.memory_space<vmem>>, %arg3: memref<1x32xf32, #tpu.memory_space<vmem>>, %arg4: memref<32x128xf32, #tpu.memory_space<vmem>>, %arg5: memref<1x128xf32, #tpu.memory_space<vmem>>, %arg6: memref<8x128xf32, #tpu.memory_space<vmem>>, %arg7: memref<64x96xf32, #tpu.memory_space<vmem>>) attributes {dimension_semantics = [], scalar_prefetch = 0 : i64, scratch_operands = 1 : i64, tpu.core_type = #tpu.core_type<tc>} {
    %c0 = arith.constant 0 : index
    %c0_0 = arith.constant 0 : index
    %0 = vector.load %arg0[%c0, %c0_0] : memref<64x1xi32, #tpu.memory_space<vmem>>, vector<64x1xi32>
    %1 = tpu.iota {dimensions = array<i32: 1>} : vector<64x16xi32>
    %2 = vector.broadcast %0 : vector<64x1xi32> to vector<64x16xi32>
    %3 = arith.cmpi eq, %2, %1 : vector<64x16xi32>
    %4 = arith.extui %3 : vector<64x16xi1> to vector<64x16xi32>
    %5 = arith.sitofp %4 : vector<64x16xi32> to vector<64x16xf32>
    %c0_1 = arith.constant 0 : index
    %c0_2 = arith.constant 0 : index
    %6 = vector.load %arg1[%c0_1, %c0_2] : memref<16x96xf32, #tpu.memory_space<vmem>>, vector<16x96xf32>
    %cst = arith.constant dense<0.000000e+00> : vector<64x96xf32>
    %7 = tpu.matmul %5, %6, %cst {dimension_numbers = #tpu.dot_dimension_numbers<[1], [0], [0], [1], [0, 0, 1, 1], [], []>} : vector<64x16xf32>, vector<16x96xf32>, vector<64x96xf32> -> vector<64x96xf32>
    %c0_3 = arith.constant 0 : index
    %c0_4 = arith.constant 0 : index
    %8 = vector.load %arg7[%c0_3, %c0_4] : memref<64x96xf32, #tpu.memory_space<vmem>>, vector<64x96xf32>
    tpu.vector_store %arg7[%c0_3, %c0_4], %7 {strides = array<i32>} : memref<64x96xf32, #tpu.memory_space<vmem>>, vector<64x96xf32>,
    %c0_5 = arith.constant 0 : index
    %c0_6 = arith.constant 0 : index
    %9 = vector.load %arg2[%c0_5, %c0_6] : memref<32x96xf32, #tpu.memory_space<vmem>>, vector<32x96xf32>
    %c0_7 = arith.constant 0 : index
    %c0_8 = arith.constant 0 : index
    %10 = vector.load %arg3[%c0_7, %c0_8] : memref<1x32xf32, #tpu.memory_space<vmem>>, vector<1x32xf32>
    %11 = vector.shape_cast %10 : vector<1x32xf32> to vector<1x32xf32>
    %12 = vector.broadcast %11 : vector<1x32xf32> to vector<8x32xf32>
    %cst_9 = arith.constant 0.000000e+00 : f32
    %13 = vector.broadcast %cst_9 : f32 to vector<8x32xf32>
    %c0_i32 = arith.constant 0 : i32
    %c8_i32 = arith.constant 8 : i32
    %14 = arith.muli %c0_i32, %c8_i32 : i32
    %15 = tpu.assume_multiple %14, 8 : i32
    %16 = arith.index_cast %15 : i32 to index
    %c0_10 = arith.constant 0 : index
    %17 = vector.load %arg7[%16, %c0_10] : memref<64x96xf32, #tpu.memory_space<vmem>>, vector<8x96xf32>
    %cst_11 = arith.constant dense<0.000000e+00> : vector<8x96xf32>
    %18 = tpu.matmul %13, %9, %cst_11 {dimension_numbers = #tpu.dot_dimension_numbers<[1], [0], [0], [1], [0, 0, 1, 1], [], []>} : vector<8x32xf32>, vector<32x96xf32>, vector<8x96xf32> -> vector<8x96xf32>
    %19 = vector.extract_strided_slice %17 {offsets = [0, 0], sizes = [8, 64], strides = [1, 1]} : vector<8x96xf32> to vector<8x64xf32>
    %20 = vector.extract_strided_slice %18 {offsets = [0, 0], sizes = [8, 64], strides = [1, 1]} : vector<8x96xf32> to vector<8x64xf32>
    %21 = arith.addf %19, %20 : vector<8x64xf32>
    %22 = arith.negf %21 : vector<8x64xf32>
    %23 = math.exp %22 : vector<8x64xf32>
    %cst_12 = arith.constant 1.000000e+00 : f32
    %24 = vector.broadcast %cst_12 : f32 to vector<8x64xf32>
    %25 = arith.addf %24, %23 : vector<8x64xf32>
    %26 = arith.divf %24, %25 : vector<8x64xf32>
    %27 = vector.extract_strided_slice %26 {offsets = [0, 0], sizes = [8, 32], strides = [1, 1]} : vector<8x64xf32> to vector<8x32xf32>
    %28 = vector.extract_strided_slice %26 {offsets = [0, 32], sizes = [8, 32], strides = [1, 1]} : vector<8x64xf32> to vector<8x32xf32>
    %29 = vector.extract_strided_slice %17 {offsets = [0, 64], sizes = [8, 32], strides = [1, 1]} : vector<8x96xf32> to vector<8x32xf32>
    %30 = vector.extract_strided_slice %18 {offsets = [0, 64], sizes = [8, 32], strides = [1, 1]} : vector<8x96xf32> to vector<8x32xf32>
    %31 = arith.addf %30, %12 : vector<8x32xf32>
    %32 = arith.mulf %27, %31 : vector<8x32xf32>
    %33 = arith.addf %29, %32 : vector<8x32xf32>
    %34 = math.tanh %33 : vector<8x32xf32>
    %cst_13 = arith.constant 1.000000e+00 : f32
    %35 = vector.broadcast %cst_13 : f32 to vector<8x32xf32>
    %36 = arith.subf %35, %28 : vector<8x32xf32>
    %37 = arith.mulf %36, %34 : vector<8x32xf32>
    %38 = arith.mulf %28, %13 : vector<8x32xf32>
    %39 = arith.addf %37, %38 : vector<8x32xf32>
    %c1_i32 = arith.constant 1 : i32
    %c8_i32_14 = arith.constant 8 : i32
    %40 = arith.muli %c1_i32, %c8_i32_14 : i32
    %41 = tpu.assume_multiple %40, 8 : i32
    %42 = arith.index_cast %41 : i32 to index
    %c0_15 = arith.constant 0 : index
    %43 = vector.load %arg7[%42, %c0_15] : memref<64x96xf32, #tpu.memory_space<vmem>>, vector<8x96xf32>
    %cst_16 = arith.constant dense<0.000000e+00> : vector<8x96xf32>
    %44 = tpu.matmul %39, %9, %cst_16 {dimension_numbers = #tpu.dot_dimension_numbers<[1], [0], [0], [1], [0, 0, 1, 1], [], []>} : vector<8x32xf32>, vector<32x96xf32>, vector<8x96xf32> -> vector<8x96xf32>
    %45 = vector.extract_strided_slice %43 {offsets = [0, 0], sizes = [8, 64], strides = [1, 1]} : vector<8x96xf32> to vector<8x64xf32>
    %46 = vector.extract_strided_slice %44 {offsets = [0, 0], sizes = [8, 64], strides = [1, 1]} : vector<8x96xf32> to vector<8x64xf32>
    %47 = arith.addf %45, %46 : vector<8x64xf32>
    %48 = arith.negf %47 : vector<8x64xf32>
    %49 = math.exp %48 : vector<8x64xf32>
    %cst_17 = arith.constant 1.000000e+00 : f32
    %50 = vector.broadcast %cst_17 : f32 to vector<8x64xf32>
    %51 = arith.addf %50, %49 : vector<8x64xf32>
    %52 = arith.divf %50, %51 : vector<8x64xf32>
    %53 = vector.extract_strided_slice %52 {offsets = [0, 0], sizes = [8, 32], strides = [1, 1]} : vector<8x64xf32> to vector<8x32xf32>
    %54 = vector.extract_strided_slice %52 {offsets = [0, 32], sizes = [8, 32], strides = [1, 1]} : vector<8x64xf32> to vector<8x32xf32>
    %55 = vector.extract_strided_slice %43 {offsets = [0, 64], sizes = [8, 32], strides = [1, 1]} : vector<8x96xf32> to vector<8x32xf32>
    %56 = vector.extract_strided_slice %44 {offsets = [0, 64], sizes = [8, 32], strides = [1, 1]} : vector<8x96xf32> to vector<8x32xf32>
    %57 = arith.addf %56, %12 : vector<8x32xf32>
    %58 = arith.mulf %53, %57 : vector<8x32xf32>
    %59 = arith.addf %55, %58 : vector<8x32xf32>
    %60 = math.tanh %59 : vector<8x32xf32>
    %cst_18 = arith.constant 1.000000e+00 : f32
    %61 = vector.broadcast %cst_18 : f32 to vector<8x32xf32>
    %62 = arith.subf %61, %54 : vector<8x32xf32>
    %63 = arith.mulf %62, %60 : vector<8x32xf32>
    %64 = arith.mulf %54, %39 : vector<8x32xf32>
    %65 = arith.addf %63, %64 : vector<8x32xf32>
    %c2_i32 = arith.constant 2 : i32
    %c8_i32_19 = arith.constant 8 : i32
    %66 = arith.muli %c2_i32, %c8_i32_19 : i32
    %67 = tpu.assume_multiple %66, 8 : i32
    %68 = arith.index_cast %67 : i32 to index
    %c0_20 = arith.constant 0 : index
    %69 = vector.load %arg7[%68, %c0_20] : memref<64x96xf32, #tpu.memory_space<vmem>>, vector<8x96xf32>
    %cst_21 = arith.constant dense<0.000000e+00> : vector<8x96xf32>
    %70 = tpu.matmul %65, %9, %cst_21 {dimension_numbers = #tpu.dot_dimension_numbers<[1], [0], [0], [1], [0, 0, 1, 1], [], []>} : vector<8x32xf32>, vector<32x96xf32>, vector<8x96xf32> -> vector<8x96xf32>
    %71 = vector.extract_strided_slice %69 {offsets = [0, 0], sizes = [8, 64], strides = [1, 1]} : vector<8x96xf32> to vector<8x64xf32>
    %72 = vector.extract_strided_slice %70 {offsets = [0, 0], sizes = [8, 64], strides = [1, 1]} : vector<8x96xf32> to vector<8x64xf32>
    %73 = arith.addf %71, %72 : vector<8x64xf32>
    %74 = arith.negf %73 : vector<8x64xf32>
    %75 = math.exp %74 : vector<8x64xf32>
    %cst_22 = arith.constant 1.000000e+00 : f32
    %76 = vector.broadcast %cst_22 : f32 to vector<8x64xf32>
    %77 = arith.addf %76, %75 : vector<8x64xf32>
    %78 = arith.divf %76, %77 : vector<8x64xf32>
    %79 = vector.extract_strided_slice %78 {offsets = [0, 0], sizes = [8, 32], strides = [1, 1]} : vector<8x64xf32> to vector<8x32xf32>
    %80 = vector.extract_strided_slice %78 {offsets = [0, 32], sizes = [8, 32], strides = [1, 1]} : vector<8x64xf32> to vector<8x32xf32>
    %81 = vector.extract_strided_slice %69 {offsets = [0, 64], sizes = [8, 32], strides = [1, 1]} : vector<8x96xf32> to vector<8x32xf32>
    %82 = vector.extract_strided_slice %70 {offsets = [0, 64], sizes = [8, 32], strides = [1, 1]} : vector<8x96xf32> to vector<8x32xf32>
    %83 = arith.addf %82, %12 : vector<8x32xf32>
    %84 = arith.mulf %79, %83 : vector<8x32xf32>
    %85 = arith.addf %81, %84 : vector<8x32xf32>
    %86 = math.tanh %85 : vector<8x32xf32>
    %cst_23 = arith.constant 1.000000e+00 : f32
    %87 = vector.broadcast %cst_23 : f32 to vector<8x32xf32>
    %88 = arith.subf %87, %80 : vector<8x32xf32>
    %89 = arith.mulf %88, %86 : vector<8x32xf32>
    %90 = arith.mulf %80, %65 : vector<8x32xf32>
    %91 = arith.addf %89, %90 : vector<8x32xf32>
    %c3_i32 = arith.constant 3 : i32
    %c8_i32_24 = arith.constant 8 : i32
    %92 = arith.muli %c3_i32, %c8_i32_24 : i32
    %93 = tpu.assume_multiple %92, 8 : i32
    %94 = arith.index_cast %93 : i32 to index
    %c0_25 = arith.constant 0 : index
    %95 = vector.load %arg7[%94, %c0_25] : memref<64x96xf32, #tpu.memory_space<vmem>>, vector<8x96xf32>
    %cst_26 = arith.constant dense<0.000000e+00> : vector<8x96xf32>
    %96 = tpu.matmul %91, %9, %cst_26 {dimension_numbers = #tpu.dot_dimension_numbers<[1], [0], [0], [1], [0, 0, 1, 1], [], []>} : vector<8x32xf32>, vector<32x96xf32>, vector<8x96xf32> -> vector<8x96xf32>
    %97 = vector.extract_strided_slice %95 {offsets = [0, 0], sizes = [8, 64], strides = [1, 1]} : vector<8x96xf32> to vector<8x64xf32>
    %98 = vector.extract_strided_slice %96 {offsets = [0, 0], sizes = [8, 64], strides = [1, 1]} : vector<8x96xf32> to vector<8x64xf32>
    %99 = arith.addf %97, %98 : vector<8x64xf32>
    %100 = arith.negf %99 : vector<8x64xf32>
    %101 = math.exp %100 : vector<8x64xf32>
    %cst_27 = arith.constant 1.000000e+00 : f32
    %102 = vector.broadcast %cst_27 : f32 to vector<8x64xf32>
    %103 = arith.addf %102, %101 : vector<8x64xf32>
    %104 = arith.divf %102, %103 : vector<8x64xf32>
    %105 = vector.extract_strided_slice %104 {offsets = [0, 0], sizes = [8, 32], strides = [1, 1]} : vector<8x64xf32> to vector<8x32xf32>
    %106 = vector.extract_strided_slice %104 {offsets = [0, 32], sizes = [8, 32], strides = [1, 1]} : vector<8x64xf32> to vector<8x32xf32>
    %107 = vector.extract_strided_slice %95 {offsets = [0, 64], sizes = [8, 32], strides = [1, 1]} : vector<8x96xf32> to vector<8x32xf32>
    %108 = vector.extract_strided_slice %96 {offsets = [0, 64], sizes = [8, 32], strides = [1, 1]} : vector<8x96xf32> to vector<8x32xf32>
    %109 = arith.addf %108, %12 : vector<8x32xf32>
    %110 = arith.mulf %105, %109 : vector<8x32xf32>
    %111 = arith.addf %107, %110 : vector<8x32xf32>
    %112 = math.tanh %111 : vector<8x32xf32>
    %cst_28 = arith.constant 1.000000e+00 : f32
    %113 = vector.broadcast %cst_28 : f32 to vector<8x32xf32>
    %114 = arith.subf %113, %106 : vector<8x32xf32>
    %115 = arith.mulf %114, %112 : vector<8x32xf32>
    %116 = arith.mulf %106, %91 : vector<8x32xf32>
    %117 = arith.addf %115, %116 : vector<8x32xf32>
    %c4_i32 = arith.constant 4 : i32
    %c8_i32_29 = arith.constant 8 : i32
    %118 = arith.muli %c4_i32, %c8_i32_29 : i32
    %119 = tpu.assume_multiple %118, 8 : i32
    %120 = arith.index_cast %119 : i32 to index
    %c0_30 = arith.constant 0 : index
    %121 = vector.load %arg7[%120, %c0_30] : memref<64x96xf32, #tpu.memory_space<vmem>>, vector<8x96xf32>
    %cst_31 = arith.constant dense<0.000000e+00> : vector<8x96xf32>
    %122 = tpu.matmul %117, %9, %cst_31 {dimension_numbers = #tpu.dot_dimension_numbers<[1], [0], [0], [1], [0, 0, 1, 1], [], []>} : vector<8x32xf32>, vector<32x96xf32>, vector<8x96xf32> -> vector<8x96xf32>
    %123 = vector.extract_strided_slice %121 {offsets = [0, 0], sizes = [8, 64], strides = [1, 1]} : vector<8x96xf32> to vector<8x64xf32>
    %124 = vector.extract_strided_slice %122 {offsets = [0, 0], sizes = [8, 64], strides = [1, 1]} : vector<8x96xf32> to vector<8x64xf32>
    %125 = arith.addf %123, %124 : vector<8x64xf32>
    %126 = arith.negf %125 : vector<8x64xf32>
    %127 = math.exp %126 : vector<8x64xf32>
    %cst_32 = arith.constant 1.000000e+00 : f32
    %128 = vector.broadcast %cst_32 : f32 to vector<8x64xf32>
    %129 = arith.addf %128, %127 : vector<8x64xf32>
    %130 = arith.divf %128, %129 : vector<8x64xf32>
    %131 = vector.extract_strided_slice %130 {offsets = [0, 0], sizes = [8, 32], strides = [1, 1]} : vector<8x64xf32> to vector<8x32xf32>
    %132 = vector.extract_strided_slice %130 {offsets = [0, 32], sizes = [8, 32], strides = [1, 1]} : vector<8x64xf32> to vector<8x32xf32>
    %133 = vector.extract_strided_slice %121 {offsets = [0, 64], sizes = [8, 32], strides = [1, 1]} : vector<8x96xf32> to vector<8x32xf32>
    %134 = vector.extract_strided_slice %122 {offsets = [0, 64], sizes = [8, 32], strides = [1, 1]} : vector<8x96xf32> to vector<8x32xf32>
    %135 = arith.addf %134, %12 : vector<8x32xf32>
    %136 = arith.mulf %131, %135 : vector<8x32xf32>
    %137 = arith.addf %133, %136 : vector<8x32xf32>
    %138 = math.tanh %137 : vector<8x32xf32>
    %cst_33 = arith.constant 1.000000e+00 : f32
    %139 = vector.broadcast %cst_33 : f32 to vector<8x32xf32>
    %140 = arith.subf %139, %132 : vector<8x32xf32>
    %141 = arith.mulf %140, %138 : vector<8x32xf32>
    %142 = arith.mulf %132, %117 : vector<8x32xf32>
    %143 = arith.addf %141, %142 : vector<8x32xf32>
    %c5_i32 = arith.constant 5 : i32
    %c8_i32_34 = arith.constant 8 : i32
    %144 = arith.muli %c5_i32, %c8_i32_34 : i32
    %145 = tpu.assume_multiple %144, 8 : i32
    %146 = arith.index_cast %145 : i32 to index
    %c0_35 = arith.constant 0 : index
    %147 = vector.load %arg7[%146, %c0_35] : memref<64x96xf32, #tpu.memory_space<vmem>>, vector<8x96xf32>
    %cst_36 = arith.constant dense<0.000000e+00> : vector<8x96xf32>
    %148 = tpu.matmul %143, %9, %cst_36 {dimension_numbers = #tpu.dot_dimension_numbers<[1], [0], [0], [1], [0, 0, 1, 1], [], []>} : vector<8x32xf32>, vector<32x96xf32>, vector<8x96xf32> -> vector<8x96xf32>
    %149 = vector.extract_strided_slice %147 {offsets = [0, 0], sizes = [8, 64], strides = [1, 1]} : vector<8x96xf32> to vector<8x64xf32>
    %150 = vector.extract_strided_slice %148 {offsets = [0, 0], sizes = [8, 64], strides = [1, 1]} : vector<8x96xf32> to vector<8x64xf32>
    %151 = arith.addf %149, %150 : vector<8x64xf32>
    %152 = arith.negf %151 : vector<8x64xf32>
    %153 = math.exp %152 : vector<8x64xf32>
    %cst_37 = arith.constant 1.000000e+00 : f32
    %154 = vector.broadcast %cst_37 : f32 to vector<8x64xf32>
    %155 = arith.addf %154, %153 : vector<8x64xf32>
    %156 = arith.divf %154, %155 : vector<8x64xf32>
    %157 = vector.extract_strided_slice %156 {offsets = [0, 0], sizes = [8, 32], strides = [1, 1]} : vector<8x64xf32> to vector<8x32xf32>
    %158 = vector.extract_strided_slice %156 {offsets = [0, 32], sizes = [8, 32], strides = [1, 1]} : vector<8x64xf32> to vector<8x32xf32>
    %159 = vector.extract_strided_slice %147 {offsets = [0, 64], sizes = [8, 32], strides = [1, 1]} : vector<8x96xf32> to vector<8x32xf32>
    %160 = vector.extract_strided_slice %148 {offsets = [0, 64], sizes = [8, 32], strides = [1, 1]} : vector<8x96xf32> to vector<8x32xf32>
    %161 = arith.addf %160, %12 : vector<8x32xf32>
    %162 = arith.mulf %157, %161 : vector<8x32xf32>
    %163 = arith.addf %159, %162 : vector<8x32xf32>
    %164 = math.tanh %163 : vector<8x32xf32>
    %cst_38 = arith.constant 1.000000e+00 : f32
    %165 = vector.broadcast %cst_38 : f32 to vector<8x32xf32>
    %166 = arith.subf %165, %158 : vector<8x32xf32>
    %167 = arith.mulf %166, %164 : vector<8x32xf32>
    %168 = arith.mulf %158, %143 : vector<8x32xf32>
    %169 = arith.addf %167, %168 : vector<8x32xf32>
    %c6_i32 = arith.constant 6 : i32
    %c8_i32_39 = arith.constant 8 : i32
    %170 = arith.muli %c6_i32, %c8_i32_39 : i32
    %171 = tpu.assume_multiple %170, 8 : i32
    %172 = arith.index_cast %171 : i32 to index
    %c0_40 = arith.constant 0 : index
    %173 = vector.load %arg7[%172, %c0_40] : memref<64x96xf32, #tpu.memory_space<vmem>>, vector<8x96xf32>
    %cst_41 = arith.constant dense<0.000000e+00> : vector<8x96xf32>
    %174 = tpu.matmul %169, %9, %cst_41 {dimension_numbers = #tpu.dot_dimension_numbers<[1], [0], [0], [1], [0, 0, 1, 1], [], []>} : vector<8x32xf32>, vector<32x96xf32>, vector<8x96xf32> -> vector<8x96xf32>
    %175 = vector.extract_strided_slice %173 {offsets = [0, 0], sizes = [8, 64], strides = [1, 1]} : vector<8x96xf32> to vector<8x64xf32>
    %176 = vector.extract_strided_slice %174 {offsets = [0, 0], sizes = [8, 64], strides = [1, 1]} : vector<8x96xf32> to vector<8x64xf32>
    %177 = arith.addf %175, %176 : vector<8x64xf32>
    %178 = arith.negf %177 : vector<8x64xf32>
    %179 = math.exp %178 : vector<8x64xf32>
    %cst_42 = arith.constant 1.000000e+00 : f32
    %180 = vector.broadcast %cst_42 : f32 to vector<8x64xf32>
    %181 = arith.addf %180, %179 : vector<8x64xf32>
    %182 = arith.divf %180, %181 : vector<8x64xf32>
    %183 = vector.extract_strided_slice %182 {offsets = [0, 0], sizes = [8, 32], strides = [1, 1]} : vector<8x64xf32> to vector<8x32xf32>
    %184 = vector.extract_strided_slice %182 {offsets = [0, 32], sizes = [8, 32], strides = [1, 1]} : vector<8x64xf32> to vector<8x32xf32>
    %185 = vector.extract_strided_slice %173 {offsets = [0, 64], sizes = [8, 32], strides = [1, 1]} : vector<8x96xf32> to vector<8x32xf32>
    %186 = vector.extract_strided_slice %174 {offsets = [0, 64], sizes = [8, 32], strides = [1, 1]} : vector<8x96xf32> to vector<8x32xf32>
    %187 = arith.addf %186, %12 : vector<8x32xf32>
    %188 = arith.mulf %183, %187 : vector<8x32xf32>
    %189 = arith.addf %185, %188 : vector<8x32xf32>
    %190 = math.tanh %189 : vector<8x32xf32>
    %cst_43 = arith.constant 1.000000e+00 : f32
    %191 = vector.broadcast %cst_43 : f32 to vector<8x32xf32>
    %192 = arith.subf %191, %184 : vector<8x32xf32>
    %193 = arith.mulf %192, %190 : vector<8x32xf32>
    %194 = arith.mulf %184, %169 : vector<8x32xf32>
    %195 = arith.addf %193, %194 : vector<8x32xf32>
    %c7_i32 = arith.constant 7 : i32
    %c8_i32_44 = arith.constant 8 : i32
    %196 = arith.muli %c7_i32, %c8_i32_44 : i32
    %197 = tpu.assume_multiple %196, 8 : i32
    %198 = arith.index_cast %197 : i32 to index
    %c0_45 = arith.constant 0 : index
    %199 = vector.load %arg7[%198, %c0_45] : memref<64x96xf32, #tpu.memory_space<vmem>>, vector<8x96xf32>
    %cst_46 = arith.constant dense<0.000000e+00> : vector<8x96xf32>
    %200 = tpu.matmul %195, %9, %cst_46 {dimension_numbers = #tpu.dot_dimension_numbers<[1], [0], [0], [1], [0, 0, 1, 1], [], []>} : vector<8x32xf32>, vector<32x96xf32>, vector<8x96xf32> -> vector<8x96xf32>
    %201 = vector.extract_strided_slice %199 {offsets = [0, 0], sizes = [8, 64], strides = [1, 1]} : vector<8x96xf32> to vector<8x64xf32>
    %202 = vector.extract_strided_slice %200 {offsets = [0, 0], sizes = [8, 64], strides = [1, 1]} : vector<8x96xf32> to vector<8x64xf32>
    %203 = arith.addf %201, %202 : vector<8x64xf32>
    %204 = arith.negf %203 : vector<8x64xf32>
    %205 = math.exp %204 : vector<8x64xf32>
    %cst_47 = arith.constant 1.000000e+00 : f32
    %206 = vector.broadcast %cst_47 : f32 to vector<8x64xf32>
    %207 = arith.addf %206, %205 : vector<8x64xf32>
    %208 = arith.divf %206, %207 : vector<8x64xf32>
    %209 = vector.extract_strided_slice %208 {offsets = [0, 0], sizes = [8, 32], strides = [1, 1]} : vector<8x64xf32> to vector<8x32xf32>
    %210 = vector.extract_strided_slice %208 {offsets = [0, 32], sizes = [8, 32], strides = [1, 1]} : vector<8x64xf32> to vector<8x32xf32>
    %211 = vector.extract_strided_slice %199 {offsets = [0, 64], sizes = [8, 32], strides = [1, 1]} : vector<8x96xf32> to vector<8x32xf32>
    %212 = vector.extract_strided_slice %200 {offsets = [0, 64], sizes = [8, 32], strides = [1, 1]} : vector<8x96xf32> to vector<8x32xf32>
    %213 = arith.addf %212, %12 : vector<8x32xf32>
    %214 = arith.mulf %209, %213 : vector<8x32xf32>
    %215 = arith.addf %211, %214 : vector<8x32xf32>
    %216 = math.tanh %215 : vector<8x32xf32>
    %cst_48 = arith.constant 1.000000e+00 : f32
    %217 = vector.broadcast %cst_48 : f32 to vector<8x32xf32>
    %218 = arith.subf %217, %210 : vector<8x32xf32>
    %219 = arith.mulf %218, %216 : vector<8x32xf32>
    %220 = arith.mulf %210, %195 : vector<8x32xf32>
    %221 = arith.addf %219, %220 : vector<8x32xf32>
    %c8_i32_49 = arith.constant 8 : i32
    %c0_50 = arith.constant 0 : index
    %c0_51 = arith.constant 0 : index
    %222 = vector.load %arg4[%c0_50, %c0_51] : memref<32x128xf32, #tpu.memory_space<vmem>>, vector<32x128xf32>
    %cst_52 = arith.constant dense<0.000000e+00> : vector<8x128xf32>
    %223 = tpu.matmul %221, %222, %cst_52 {dimension_numbers = #tpu.dot_dimension_numbers<[1], [0], [0], [1], [0, 0, 1, 1], [], []>} : vector<8x32xf32>, vector<32x128xf32>, vector<8x128xf32> -> vector<8x128xf32>
    %c0_53 = arith.constant 0 : index
    %c0_54 = arith.constant 0 : index
    %224 = vector.load %arg5[%c0_53, %c0_54] : memref<1x128xf32, #tpu.memory_space<vmem>>, vector<1x128xf32>
    %225 = vector.broadcast %224 : vector<1x128xf32> to vector<8x128xf32>
    %226 = arith.addf %223, %225 : vector<8x128xf32>
    %c0_55 = arith.constant 0 : index
    %c0_56 = arith.constant 0 : index
    %227 = vector.load %arg6[%c0_55, %c0_56] : memref<8x128xf32, #tpu.memory_space<vmem>>, vector<8x128xf32>
    tpu.vector_store %arg6[%c0_55, %c0_56], %226 {strides = array<i32>} : memref<8x128xf32, #tpu.memory_space<vmem>>, vector<8x128xf32>,
    return
  }
}

</mosaic_0001>

<llo_original>
// kernel: tpu_custom_call.1
$region0: #{tpu_custom_call.1}
  #allocation0 [shape = 'u32[]', space=smem, size = 0x4, offset = 0x4, fixed_abs, tag = 'smem constant byte address 0x4 - core index']
  #allocation1 [shape = 'u32[144,128]{1,0:T(1,128)}', space=vmem, size = 0x12000, scoped, tag = 'internal scratch']
  #allocation2 [shape = 'f32[64,96]{1,0:T(8,128)}', space=vmem, size = 0x8000, scoped, tag = 'scratch operand']
  %s0 = inlined_call_operand.vmem [shape: s32[64,1], index: 0, kind: input, shape index: {}]
  %s1 = inlined_call_operand.hbm [shape: f32[16,96], index: 1, kind: input, shape index: {}]
  %s2 = inlined_call_operand.vmem [shape: f32[32,96], index: 2, kind: input, shape index: {}]
  %s3 = inlined_call_operand.vmem [shape: f32[1,32], index: 3, kind: input, shape index: {}]
  %s4 = inlined_call_operand.vmem [shape: f32[32,128], index: 4, kind: input, shape index: {}]
  %s5 = inlined_call_operand.vmem [shape: f32[1,128], index: 5, kind: input, shape index: {}]
  %s6 = inlined_call_operand.hbm [shape: f32[8,128], index: 6, kind: output, shape index: {}]
  %s7 = sld [smem:[#allocation0]]
  $region38: #{tpu_custom_call.1} parent=0
    _
  %s9 = ssub.s32 1, %s7
  %s10 = scalar_select 0, %s9, %s7
  $region1: #{tpu_custom_call.1} parent=0
    #allocation3 [shape = 'u8[8192]{0}', space=vmem, size = 0x2000, scoped, tag = 'input window, operand 1, single buffered']
    #allocation4 [shape = 's32[1]{0}', space=sflag, size = 0x4, scoped, tag = 'scoped memory for tpu_custom_call.1']
    #allocation5 [shape = 's32[1]{0}', space=sflag, size = 0x4, scoped, tag = 'scoped memory for tpu_custom_call.1']
    #allocation6 [shape = 'u8[4096]{0}', space=vmem, size = 0x1000, scoped, tag = 'output window, operand 0, single buffered']
    %11 = vsyncpa [#allocation4], 0
    %12 = vsyncpa [#allocation5], 0
    // Predicated region
    $region2: #{tpu_custom_call.1} parent=1 // pred_check
      _
    $region3: #{tpu_custom_call.1} parent=1 // pred_check_branch
      %14 = sbr.rel (0) target = $region5
    $region4: #{tpu_custom_call.1} parent=1 // pred_region
      _
    $region5: #{tpu_custom_call.1} parent=1 // pred_fallthru
      _
    // Predicated region
    $region6: #{tpu_custom_call.1} parent=1 // pred_check
      _
    $region7: #{tpu_custom_call.1} parent=1 // pred_check_branch
      %16 = sbr.rel (0) target = $region9
    $region8: #{tpu_custom_call.1} parent=1 // pred_region
      %s18 = ssub.s32 256, 256
      %19 = vsyncadd [#allocation4], %s18
      %s20 = sshll.u32 [#allocation3], 4
      %s21 = int_to_ptr.vmem [resolvable:$true] %s20
      %26 = dma.hbm_to_vmem [thread:$0]  %s1, 256, %s21, [#allocation4], 128, 128, 8
    $region9: #{tpu_custom_call.1} parent=1 // pred_fallthru
      _
    // Predicated region
    $region10: #{tpu_custom_call.1} parent=1 // pred_check
      _
    $region11: #{tpu_custom_call.1} parent=1 // pred_check_branch
      %28 = sbr.rel (0) target = $region13
    $region12: #{tpu_custom_call.1} parent=1 // pred_region
      _
    $region13: #{tpu_custom_call.1} parent=1 // pred_fallthru
      _
    // Predicated region
    $region14: #{tpu_custom_call.1} parent=1 // pred_check
      _
    $region15: #{tpu_custom_call.1} parent=1 // pred_check_branch
      %30 = sbr.rel (0) target = $region17
    $region16: #{tpu_custom_call.1} parent=1 // pred_region
      _
    $region17: #{tpu_custom_call.1} parent=1 // pred_fallthru
      _
    // Predicated region
    $region18: #{tpu_custom_call.1} parent=1 // pred_check
      _
    $region19: #{tpu_custom_call.1} parent=1 // pred_check_branch
      %32 = sbr.rel (0) target = $region21
    $region20: #{tpu_custom_call.1} parent=1 // pred_region
      _
    $region21: #{tpu_custom_call.1} parent=1 // pred_fallthru
      _
    // Predicated region
    $region22: #{tpu_custom_call.1} parent=1 // pred_check
      _
    $region23: #{tpu_custom_call.1} parent=1 // pred_check_branch
      %34 = sbr.rel (0) target = $region25
    $region24: #{tpu_custom_call.1} parent=1 // pred_region
      _
    $region25: #{tpu_custom_call.1} parent=1 // pred_fallthru
      _
    // Predicated region
    $region26: #{tpu_custom_call.1} parent=1 // pred_check
      _
    $region27: #{tpu_custom_call.1} parent=1 // pred_check_branch
      %36 = sbr.rel (0) target = $region29
    $region28: #{tpu_custom_call.1} parent=1 // pred_region
      %37 = dma.done [#allocation4], 256
    $region29: #{tpu_custom_call.1} parent=1 // pred_fallthru
      _
    %v38 = vld [vmem:[%s0] sm:$0xff]
    %v39 = vld [vmem:[%s0 + $0x8] sm:$0xff]
    %v40 = vld [vmem:[%s0 + $0x10] sm:$0xff]
    %v41 = vld [vmem:[%s0 + $0x18] sm:$0xff]
    %v42 = vld [vmem:[%s0 + $0x20] sm:$0xff]
    %v43 = vld [vmem:[%s0 + $0x28] sm:$0xff]
    %v44 = vld [vmem:[%s0 + $0x30] sm:$0xff]
    %v45 = vld [vmem:[%s0 + $0x38] sm:$0xff]
    %v46 = vlaneseq
    %v47 = vand.u32 %v46, 127
    %48 = vset.pattern.permute.xlu0 0
    %49 = vperm.xlu0 %48, %v38
    %v50 = vpop.permute.xlu0 %49
    %51 = vset.pattern.permute.xlu0 0
    %52 = vperm.xlu0 %51, %v39
    %v53 = vpop.permute.xlu0 %52
    %54 = vset.pattern.permute.xlu0 0
    %55 = vperm.xlu0 %54, %v40
    %v56 = vpop.permute.xlu0 %55
    %57 = vset.pattern.permute.xlu0 0
    %58 = vperm.xlu0 %57, %v41
    %v59 = vpop.permute.xlu0 %58
    %60 = vset.pattern.permute.xlu0 0
    %61 = vperm.xlu0 %60, %v42
    %v62 = vpop.permute.xlu0 %61
    %63 = vset.pattern.permute.xlu0 0
    %64 = vperm.xlu0 %63, %v43
    %v65 = vpop.permute.xlu0 %64
    %66 = vset.pattern.permute.xlu0 0
    %67 = vperm.xlu0 %66, %v44
    %v68 = vpop.permute.xlu0 %67
    %69 = vset.pattern.permute.xlu0 0
    %70 = vperm.xlu0 %69, %v45
    %v71 = vpop.permute.xlu0 %70
    %vm72 = vcmp.eq.s32.totalorder %v50, %v47
    %vm73 = vcmp.eq.s32.totalorder %v53, %v47
    %vm74 = vcmp.eq.s32.totalorder %v56, %v47
    %vm75 = vcmp.eq.s32.totalorder %v59, %v47
    %vm76 = vcmp.eq.s32.totalorder %v62, %v47
    %vm77 = vcmp.eq.s32.totalorder %v65, %v47
    %vm78 = vcmp.eq.s32.totalorder %v68, %v47
    %vm79 = vcmp.eq.s32.totalorder %v71, %v47
    %v80 = vsel %vm72, 1, 0
    %v81 = vsel %vm73, 1, 0
    %v82 = vsel %vm74, 1, 0
    %v83 = vsel %vm75, 1, 0
    %v84 = vsel %vm76, 1, 0
    %v85 = vsel %vm77, 1, 0
    %v86 = vsel %vm78, 1, 0
    %v87 = vsel %vm79, 1, 0
    %v88 = vcvt.s32.f32 %v80
    %v89 = vcvt.s32.f32 %v81
    %v90 = vcvt.s32.f32 %v82
    %v91 = vcvt.s32.f32 %v83
    %v92 = vcvt.s32.f32 %v84
    %v93 = vcvt.s32.f32 %v85
    %v94 = vcvt.s32.f32 %v86
    %v95 = vcvt.s32.f32 %v87
    %v96 = vld [vmem:[#allocation3] sm:$0xff]
    %v97 = vld [vmem:[#allocation3 + $0x8] sm:$0xff]
    %vm98 = vcmask 130048
    %v100 = vsel %vm98, %v88, 0
    %v103 = vsel %vm98, %v89, 0
    %v106 = vsel %vm98, %v90, 0
    %v109 = vsel %vm98, %v91, 0
    %v112 = vsel %vm98, %v92, 0
    %v115 = vsel %vm98, %v93, 0
    %v118 = vsel %vm98, %v94, 0
    %v121 = vsel %vm98, %v95, 0
    %123 = vmatprep.subr.mxu0 0.0
    %124 = vmatpush1.msra.mxu0 %v96
    %125 = vmatprep.subr.mxu0 0.0
    %126 = vmatpush1.msra.mxu0 %v97
    %127 = vmatprep.subr.mxu0 0.0
    %128 = vmatpush1.msra.mxu0 0.0
    %129 = vmatprep.subr.mxu0 0.0
    %130 = vmatpush1.msra.mxu0 0.0
    %131 = vmatprep.subr.mxu0 0.0
    %132 = vmatpush1.msra.mxu0 0.0
    %133 = vmatprep.subr.mxu0 0.0
    %134 = vmatpush1.msra.mxu0 0.0
    %135 = vmatprep.subr.mxu0 0.0
    %136 = vmatpush1.msra.mxu0 0.0
    %137 = vmatprep.subr.mxu0 0.0
    %138 = vmatpush1.msra.mxu0 0.0
    %139 = vmatprep.subr.mxu0 0.0
    %140 = vmatpush1.msra.mxu0 0.0
    %141 = vmatprep.subr.mxu0 0.0
    %142 = vmatpush1.msra.mxu0 0.0
    %143 = vmatprep.subr.mxu0 0.0
    %144 = vmatpush1.msra.mxu0 0.0
    %145 = vmatprep.subr.mxu0 0.0
    %146 = vmatpush1.msra.mxu0 0.0
    %147 = vmatprep.subr.mxu0 0.0
    %148 = vmatpush1.msra.mxu0 0.0
    %149 = vmatprep.subr.mxu0 0.0
    %150 = vmatpush1.msra.mxu0 0.0
    %151 = vmatprep.subr.mxu0 0.0
    %152 = vmatpush1.msra.mxu0 0.0
    %153 = vmatprep.subr.mxu0 0.0
    %154 = vmatpush1.msra.mxu0 0.0
    %155 = vmatprep.subr.mxu0 0.0
    %156 = vmatpush1.msra.mxu0 0.0
    %157 = vmatprep.subr.mxu0 0.0
    %158 = vmatpush1.msra.mxu0 0.0
    %159 = vmatprep.subr.mxu0 0.0
    %160 = vmatpush1.msra.mxu0 0.0
    %161 = vmatprep.subr.mxu0 0.0
    %162 = vmatpush1.msra.mxu0 0.0
    %163 = vmatprep.subr.mxu0 0.0
    %164 = vmatpush1.msra.mxu0 0.0
    %165 = vmatprep.subr.mxu0 0.0
    %166 = vmatpush1.msra.mxu0 0.0
    %167 = vmatprep.subr.mxu0 0.0
    %168 = vmatpush1.msra.mxu0 0.0
    %169 = vmatprep.subr.mxu0 0.0
    %170 = vmatpush1.msra.mxu0 0.0
    %171 = vmatprep.subr.mxu0 0.0
    %172 = vmatpush1.msra.mxu0 0.0
    %173 = vmatprep.subr.mxu0 0.0
    %174 = vmatpush1.msra.mxu0 0.0
    %175 = vmatprep.subr.mxu0 0.0
    %176 = vmatpush1.msra.mxu0 0.0
    %177 = vmatprep.subr.mxu0 0.0
    %178 = vmatpush1.msra.mxu0 0.0
    %179 = vmatprep.subr.mxu0 0.0
    %180 = vmatpush1.msra.mxu0 0.0
    %181 = vmatprep.subr.mxu0 0.0
    %182 = vmatpush1.msra.mxu0 0.0
    %183 = vmatprep.subr.mxu0 0.0
    %184 = vmatpush1.msra.mxu0 0.0
    %185 = vmatprep.subr.mxu0 0.0
    %186 = vmatpush1.msra.mxu0 0.0
    %187 = vmatprep.mubr.f32.mxu0 0.0
    %188 = vmatmul.mubr.f32.gmra.mrb[0].mxu0 %v100
    %v189 = vpop.f32.mrb[0].mxu0
    %v190 = vadd.f32 0.0, %v189
    %v191 = vpop.f32.mrb[0].mxu0
    %192 = vmatprep.mubr.f32.mxu0 0.0
    %193 = vmatmul.mubr.f32.gmra.mrb[0].mxu0 %v103
    %v194 = vpop.f32.mrb[0].mxu0
    %v195 = vadd.f32 0.0, %v194
    %v196 = vpop.f32.mrb[0].mxu0
    %197 = vmatprep.mubr.f32.mxu0 0.0
    %198 = vmatmul.mubr.f32.gmra.mrb[0].mxu0 %v106
    %v199 = vpop.f32.mrb[0].mxu0
    %v200 = vadd.f32 0.0, %v199
    %v201 = vpop.f32.mrb[0].mxu0
    %202 = vmatprep.mubr.f32.mxu0 0.0
    %203 = vmatmul.mubr.f32.gmra.mrb[0].mxu0 %v109
    %v204 = vpop.f32.mrb[0].mxu0
    %v205 = vadd.f32 0.0, %v204
    %v206 = vpop.f32.mrb[0].mxu0
    %207 = vmatprep.mubr.f32.mxu0 0.0
    %208 = vmatmul.mubr.f32.gmra.mrb[0].mxu0 %v112
    %v209 = vpop.f32.mrb[0].mxu0
    %v210 = vadd.f32 0.0, %v209
    %v211 = vpop.f32.mrb[0].mxu0
    %212 = vmatprep.mubr.f32.mxu0 0.0
    %213 = vmatmul.mubr.f32.gmra.mrb[0].mxu0 %v115
    %v214 = vpop.f32.mrb[0].mxu0
    %v215 = vadd.f32 0.0, %v214
    %v216 = vpop.f32.mrb[0].mxu0
    %217 = vmatprep.mubr.f32.mxu0 0.0
    %218 = vmatmul.mubr.f32.gmra.mrb[0].mxu0 %v118
    %v219 = vpop.f32.mrb[0].mxu0
    %v220 = vadd.f32 0.0, %v219
    %v221 = vpop.f32.mrb[0].mxu0
    %222 = vmatprep.mubr.f32.mxu0 0.0
    %223 = vmatmul.mubr.f32.gmra.mrb[0].mxu0 %v121
    %v224 = vpop.f32.mrb[0].mxu0
    %v225 = vadd.f32 0.0, %v224
    %v226 = vpop.f32.mrb[0].mxu0
    %227 = vdwg.mxu0
    %vm228 = vcmask 785408
    %229 = vst.msk [vmem:[#allocation2] sm:$0xff] %vm228, %v190
    %230 = vst.msk [vmem:[#allocation2 + $0x8] sm:$0xff] %vm228, %v195
    %231 = vst.msk [vmem:[#allocation2 + $0x10] sm:$0xff] %vm228, %v200
    %232 = vst.msk [vmem:[#allocation2 + $0x18] sm:$0xff] %vm228, %v205
    %233 = vst.msk [vmem:[#allocation2 + $0x20] sm:$0xff] %vm228, %v210
    %234 = vst.msk [vmem:[#allocation2 + $0x28] sm:$0xff] %vm228, %v215
    %235 = vst.msk [vmem:[#allocation2 + $0x30] sm:$0xff] %vm228, %v220
    %236 = vst.msk [vmem:[#allocation2 + $0x38] sm:$0xff] %vm228, %v225
    %v237 = vld [vmem:[%s2] sm:$0xff]
    %v238 = vld [vmem:[%s2 + $0x8] sm:$0xff]
    %v239 = vld [vmem:[%s2 + $0x10] sm:$0xff]
    %v240 = vld [vmem:[%s2 + $0x18] sm:$0xff]
    %v241 = vld [vmem:[%s3] sm:$0x1]
    %v243 = vlaneseq
    %v244 = vshrl.u32 %v243, 7
    %v245 = vsub.s32 0, %v244
    %v246 = vrot.slane %v241, %v245
    %v247 = vld [vmem:[#allocation2] sm:$0xff]
    %vm248 = vcmask 261120
    %v250 = vsel %vm248, 0.0, 0
    %252 = vmatprep.subr.mxu0 0.0
    %253 = vmatpush1.msra.mxu0 %v237
    %254 = vmatprep.subr.mxu0 0.0
    %255 = vmatpush1.msra.mxu0 %v238
    %256 = vmatprep.subr.mxu0 0.0
    %257 = vmatpush1.msra.mxu0 %v239
    %258 = vmatprep.subr.mxu0 0.0
    %259 = vmatpush1.msra.mxu0 %v240
    %260 = vmatprep.subr.mxu0 0.0
    %261 = vmatpush1.msra.mxu0 0.0
    %262 = vmatprep.subr.mxu0 0.0
    %263 = vmatpush1.msra.mxu0 0.0
    %264 = vmatprep.subr.mxu0 0.0
    %265 = vmatpush1.msra.mxu0 0.0
    %266 = vmatprep.subr.mxu0 0.0
    %267 = vmatpush1.msra.mxu0 0.0
    %268 = vmatprep.subr.mxu0 0.0
    %269 = vmatpush1.msra.mxu0 0.0
    %270 = vmatprep.subr.mxu0 0.0
    %271 = vmatpush1.msra.mxu0 0.0
    %272 = vmatprep.subr.mxu0 0.0
    %273 = vmatpush1.msra.mxu0 0.0
    %274 = vmatprep.subr.mxu0 0.0
    %275 = vmatpush1.msra.mxu0 0.0
    %276 = vmatprep.subr.mxu0 0.0
    %277 = vmatpush1.msra.mxu0 0.0
    %278 = vmatprep.subr.mxu0 0.0
    %279 = vmatpush1.msra.mxu0 0.0
    %280 = vmatprep.subr.mxu0 0.0
    %281 = vmatpush1.msra.mxu0 0.0
    %282 = vmatprep.subr.mxu0 0.0
    %283 = vmatpush1.msra.mxu0 0.0
    %284 = vmatprep.subr.mxu0 0.0
    %285 = vmatpush1.msra.mxu0 0.0
    %286 = vmatprep.subr.mxu0 0.0
    %287 = vmatpush1.msra.mxu0 0.0
    %288 = vmatprep.subr.mxu0 0.0
    %289 = vmatpush1.msra.mxu0 0.0
    %290 = vmatprep.subr.mxu0 0.0
    %291 = vmatpush1.msra.mxu0 0.0
    %292 = vmatprep.subr.mxu0 0.0
    %293 = vmatpush1.msra.mxu0 0.0
    %294 = vmatprep.subr.mxu0 0.0
    %295 = vmatpush1.msra.mxu0 0.0
    %296 = vmatprep.subr.mxu0 0.0
    %297 = vmatpush1.msra.mxu0 0.0
    %298 = vmatprep.subr.mxu0 0.0
    %299 = vmatpush1.msra.mxu0 0.0
    %300 = vmatprep.subr.mxu0 0.0
    %301 = vmatpush1.msra.mxu0 0.0
    %302 = vmatprep.subr.mxu0 0.0
    %303 = vmatpush1.msra.mxu0 0.0
    %304 = vmatprep.subr.mxu0 0.0
    %305 = vmatpush1.msra.mxu0 0.0
    %306 = vmatprep.subr.mxu0 0.0
    %307 = vmatpush1.msra.mxu0 0.0
    %308 = vmatprep.subr.mxu0 0.0
    %309 = vmatpush1.msra.mxu0 0.0
    %310 = vmatprep.subr.mxu0 0.0
    %311 = vmatpush1.msra.mxu0 0.0
    %312 = vmatprep.subr.mxu0 0.0
    %313 = vmatpush1.msra.mxu0 0.0
    %314 = vmatprep.subr.mxu0 0.0
    %315 = vmatpush1.msra.mxu0 0.0
    %316 = vmatprep.mubr.f32.mxu0 0.0
    %317 = vmatmul.mubr.f32.gmra.mrb[0].mxu0 %v250
    %v318 = vpop.f32.mrb[0].mxu0
    %v319 = vadd.f32 0.0, %v318
    %v320 = vpop.f32.mrb[0].mxu0
    %321 = vdwg.mxu0
    %v322 = vadd.f32 %v247, %v319
    %v323 = vxor.u32 %v322, 2147483648
    %v324 = vmul.f32 %v323, 1.442695
    %v325 = vpow.pop %v324
    %v326 = vadd.f32 %v325, 1.0
    %v327 = vrcp.pop %v326
    %v328 = vmul.f32 1.0, %v327
    %329 = vrot.lane.b32.xlu0 %v246, 64
    %v330 = vpop.permute.xlu0 %329
    %v332 = vadd.f32 %v319, %v330
    %334 = vrot.lane.b32.xlu0 %v332, 64
    %v335 = vpop.permute.xlu0 %334
    %v337 = vmul.f32 %v328, %v335
    %339 = vrot.lane.b32.xlu0 %v337, 64
    %v340 = vpop.permute.xlu0 %339
    %v342 = vadd.f32 %v247, %v340
    %v343 = vtanh.pop %v342
    %v344 = vsub.f32 1.0, %v328
    %346 = vrot.lane.b32.xlu0 %v343, 96
    %v347 = vpop.permute.xlu0 %346
    %v349 = vmul.f32 %v344, %v347
    %v350 = vmul.f32 %v328, 0.0
    %v351 = vadd.f32 %v349, %v350
    %s352 = scalar_lea.vmem [#allocation2], 8
    %v353 = vld [vmem:[%s352] sm:$0xff]
    %355 = vrot.lane.b32.xlu0 %v351, 96
    %v356 = vpop.permute.xlu0 %355
    %v357 = vsel %vm248, %v356, 0
    %359 = vmatprep.subr.mxu0 0.0
    %360 = vmatpush1.msra.mxu0 %v237
    %361 = vmatprep.subr.mxu0 0.0
    %362 = vmatpush1.msra.mxu0 %v238
    %363 = vmatprep.subr.mxu0 0.0
    %364 = vmatpush1.msra.mxu0 %v239
    %365 = vmatprep.subr.mxu0 0.0
    %366 = vmatpush1.msra.mxu0 %v240
    %367 = vmatprep.subr.mxu0 0.0
    %368 = vmatpush1.msra.mxu0 0.0
    %369 = vmatprep.subr.mxu0 0.0
    %370 = vmatpush1.msra.mxu0 0.0
    %371 = vmatprep.subr.mxu0 0.0
    %372 = vmatpush1.msra.mxu0 0.0
    %373 = vmatprep.subr.mxu0 0.0
    %374 = vmatpush1.msra.mxu0 0.0
    %375 = vmatprep.subr.mxu0 0.0
    %376 = vmatpush1.msra.mxu0 0.0
    %377 = vmatprep.subr.mxu0 0.0
    %378 = vmatpush1.msra.mxu0 0.0
    %379 = vmatprep.subr.mxu0 0.0
    %380 = vmatpush1.msra.mxu0 0.0
    %381 = vmatprep.subr.mxu0 0.0
    %382 = vmatpush1.msra.mxu0 0.0
    %383 = vmatprep.subr.mxu0 0.0
    %384 = vmatpush1.msra.mxu0 0.0
    %385 = vmatprep.subr.mxu0 0.0
    %386 = vmatpush1.msra.mxu0 0.0
    %387 = vmatprep.subr.mxu0 0.0
    %388 = vmatpush1.msra.mxu0 0.0
    %389 = vmatprep.subr.mxu0 0.0
    %390 = vmatpush1.msra.mxu0 0.0
    %391 = vmatprep.subr.mxu0 0.0
    %392 = vmatpush1.msra.mxu0 0.0
    %393 = vmatprep.subr.mxu0 0.0
    %394 = vmatpush1.msra.mxu0 0.0
    %395 = vmatprep.subr.mxu0 0.0
    %396 = vmatpush1.msra.mxu0 0.0
    %397 = vmatprep.subr.mxu0 0.0
    %398 = vmatpush1.msra.mxu0 0.0
    %399 = vmatprep.subr.mxu0 0.0
    %400 = vmatpush1.msra.mxu0 0.0
    %401 = vmatprep.subr.mxu0 0.0
    %402 = vmatpush1.msra.mxu0 0.0
    %403 = vmatprep.subr.mxu0 0.0
    %404 = vmatpush1.msra.mxu0 0.0
    %405 = vmatprep.subr.mxu0 0.0
    %406 = vmatpush1.msra.mxu0 0.0
    %407 = vmatprep.subr.mxu0 0.0
    %408 = vmatpush1.msra.mxu0 0.0
    %409 = vmatprep.subr.mxu0 0.0
    %410 = vmatpush1.msra.mxu0 0.0
    %411 = vmatprep.subr.mxu0 0.0
    %412 = vmatpush1.msra.mxu0 0.0
    %413 = vmatprep.subr.mxu0 0.0
    %414 = vmatpush1.msra.mxu0 0.0
    %415 = vmatprep.subr.mxu0 0.0
    %416 = vmatpush1.msra.mxu0 0.0
    %417 = vmatprep.subr.mxu0 0.0
    %418 = vmatpush1.msra.mxu0 0.0
    %419 = vmatprep.subr.mxu0 0.0
    %420 = vmatpush1.msra.mxu0 0.0
    %421 = vmatprep.subr.mxu0 0.0
    %422 = vmatpush1.msra.mxu0 0.0
    %423 = vmatprep.mubr.f32.mxu0 0.0
    %424 = vmatmul.mubr.f32.gmra.mrb[0].mxu0 %v357
    %v425 = vpop.f32.mrb[0].mxu0
    %v426 = vadd.f32 0.0, %v425
    %v427 = vpop.f32.mrb[0].mxu0
    %428 = vdwg.mxu0
    %v429 = vadd.f32 %v353, %v426
    %v430 = vxor.u32 %v429, 2147483648
    %v431 = vmul.f32 %v430, 1.442695
    %v432 = vpow.pop %v431
    %v433 = vadd.f32 %v432, 1.0
    %v434 = vrcp.pop %v433
    %v435 = vmul.f32 1.0, %v434
    %v436 = vadd.f32 %v426, %v330
    %438 = vrot.lane.b32.xlu0 %v436, 64
    %v439 = vpop.permute.xlu0 %438
    %v441 = vmul.f32 %v435, %v439
    %443 = vrot.lane.b32.xlu0 %v441, 64
    %v444 = vpop.permute.xlu0 %443
    %v446 = vadd.f32 %v353, %v444
    %v447 = vtanh.pop %v446
    %v448 = vsub.f32 1.0, %v435
    %450 = vrot.lane.b32.xlu0 %v447, 96
    %v451 = vpop.permute.xlu0 %450
    %v453 = vmul.f32 %v448, %v451
    %v454 = vmul.f32 %v435, %v351
    %v455 = vadd.f32 %v453, %v454
    %s456 = scalar_lea.vmem [#allocation2], 16
    %v457 = vld [vmem:[%s456] sm:$0xff]
    %459 = vrot.lane.b32.xlu0 %v455, 96
    %v460 = vpop.permute.xlu0 %459
    %v461 = vsel %vm248, %v460, 0
    %463 = vmatprep.subr.mxu0 0.0
    %464 = vmatpush1.msra.mxu0 %v237
    %465 = vmatprep.subr.mxu0 0.0
    %466 = vmatpush1.msra.mxu0 %v238
    %467 = vmatprep.subr.mxu0 0.0
    %468 = vmatpush1.msra.mxu0 %v239
    %469 = vmatprep.subr.mxu0 0.0
    %470 = vmatpush1.msra.mxu0 %v240
    %471 = vmatprep.subr.mxu0 0.0
    %472 = vmatpush1.msra.mxu0 0.0
    %473 = vmatprep.subr.mxu0 0.0
    %474 = vmatpush1.msra.mxu0 0.0
    %475 = vmatprep.subr.mxu0 0.0
    %476 = vmatpush1.msra.mxu0 0.0
    %477 = vmatprep.subr.mxu0 0.0
    %478 = vmatpush1.msra.mxu0 0.0
    %479 = vmatprep.subr.mxu0 0.0
    %480 = vmatpush1.msra.mxu0 0.0
    %481 = vmatprep.subr.mxu0 0.0
    %482 = vmatpush1.msra.mxu0 0.0
    %483 = vmatprep.subr.mxu0 0.0
    %484 = vmatpush1.msra.mxu0 0.0
    %485 = vmatprep.subr.mxu0 0.0
    %486 = vmatpush1.msra.mxu0 0.0
    %487 = vmatprep.subr.mxu0 0.0
    %488 = vmatpush1.msra.mxu0 0.0
    %489 = vmatprep.subr.mxu0 0.0
    %490 = vmatpush1.msra.mxu0 0.0
    %491 = vmatprep.subr.mxu0 0.0
    %492 = vmatpush1.msra.mxu0 0.0
    %493 = vmatprep.subr.mxu0 0.0
    %494 = vmatpush1.msra.mxu0 0.0
    %495 = vmatprep.subr.mxu0 0.0
    %496 = vmatpush1.msra.mxu0 0.0
    %497 = vmatprep.subr.mxu0 0.0
    %498 = vmatpush1.msra.mxu0 0.0
    %499 = vmatprep.subr.mxu0 0.0
    %500 = vmatpush1.msra.mxu0 0.0
    %501 = vmatprep.subr.mxu0 0.0
    %502 = vmatpush1.msra.mxu0 0.0
    %503 = vmatprep.subr.mxu0 0.0
    %504 = vmatpush1.msra.mxu0 0.0
    %505 = vmatprep.subr.mxu0 0.0
    %506 = vmatpush1.msra.mxu0 0.0
    %507 = vmatprep.subr.mxu0 0.0
    %508 = vmatpush1.msra.mxu0 0.0
    %509 = vmatprep.subr.mxu0 0.0
    %510 = vmatpush1.msra.mxu0 0.0
    %511 = vmatprep.subr.mxu0 0.0
    %512 = vmatpush1.msra.mxu0 0.0
    %513 = vmatprep.subr.mxu0 0.0
    %514 = vmatpush1.msra.mxu0 0.0
    %515 = vmatprep.subr.mxu0 0.0
    %516 = vmatpush1.msra.mxu0 0.0
    %517 = vmatprep.subr.mxu0 0.0
    %518 = vmatpush1.msra.mxu0 0.0
    %519 = vmatprep.subr.mxu0 0.0
    %520 = vmatpush1.msra.mxu0 0.0
    %521 = vmatprep.subr.mxu0 0.0
    %522 = vmatpush1.msra.mxu0 0.0
    %523 = vmatprep.subr.mxu0 0.0
    %524 = vmatpush1.msra.mxu0 0.0
    %525 = vmatprep.subr.mxu0 0.0
    %526 = vmatpush1.msra.mxu0 0.0
    %527 = vmatprep.mubr.f32.mxu0 0.0
    %528 = vmatmul.mubr.f32.gmra.mrb[0].mxu0 %v461
    %v529 = vpop.f32.mrb[0].mxu0
    %v530 = vadd.f32 0.0, %v529
    %v531 = vpop.f32.mrb[0].mxu0
    %532 = vdwg.mxu0
    %v533 = vadd.f32 %v457, %v530
    %v534 = vxor.u32 %v533, 2147483648
    %v535 = vmul.f32 %v534, 1.442695
    %v536 = vpow.pop %v535
    %v537 = vadd.f32 %v536, 1.0
    %v538 = vrcp.pop %v537
    %v539 = vmul.f32 1.0, %v538
    %v540 = vadd.f32 %v530, %v330
    %542 = vrot.lane.b32.xlu0 %v540, 64
    %v543 = vpop.permute.xlu0 %542
    %v545 = vmul.f32 %v539, %v543
    %547 = vrot.lane.b32.xlu0 %v545, 64
    %v548 = vpop.permute.xlu0 %547
    %v550 = vadd.f32 %v457, %v548
    %v551 = vtanh.pop %v550
    %v552 = vsub.f32 1.0, %v539
    %554 = vrot.lane.b32.xlu0 %v551, 96
    %v555 = vpop.permute.xlu0 %554
    %v557 = vmul.f32 %v552, %v555
    %v558 = vmul.f32 %v539, %v455
    %v559 = vadd.f32 %v557, %v558
    %s560 = scalar_lea.vmem [#allocation2], 24
    %v561 = vld [vmem:[%s560] sm:$0xff]
    %563 = vrot.lane.b32.xlu0 %v559, 96
    %v564 = vpop.permute.xlu0 %563
    %v565 = vsel %vm248, %v564, 0
    %567 = vmatprep.subr.mxu0 0.0
    %568 = vmatpush1.msra.mxu0 %v237
    %569 = vmatprep.subr.mxu0 0.0
    %570 = vmatpush1.msra.mxu0 %v238
    %571 = vmatprep.subr.mxu0 0.0
    %572 = vmatpush1.msra.mxu0 %v239
    %573 = vmatprep.subr.mxu0 0.0
    %574 = vmatpush1.msra.mxu0 %v240
    %575 = vmatprep.subr.mxu0 0.0
    %576 = vmatpush1.msra.mxu0 0.0
    %577 = vmatprep.subr.mxu0 0.0
    %578 = vmatpush1.msra.mxu0 0.0
    %579 = vmatprep.subr.mxu0 0.0
    %580 = vmatpush1.msra.mxu0 0.0
    %581 = vmatprep.subr.mxu0 0.0
    %582 = vmatpush1.msra.mxu0 0.0
    %583 = vmatprep.subr.mxu0 0.0
    %584 = vmatpush1.msra.mxu0 0.0
    %585 = vmatprep.subr.mxu0 0.0
    %586 = vmatpush1.msra.mxu0 0.0
    %587 = vmatprep.subr.mxu0 0.0
    %588 = vmatpush1.msra.mxu0 0.0
    %589 = vmatprep.subr.mxu0 0.0
    %590 = vmatpush1.msra.mxu0 0.0
    %591 = vmatprep.subr.mxu0 0.0
    %592 = vmatpush1.msra.mxu0 0.0
    %593 = vmatprep.subr.mxu0 0.0
    %594 = vmatpush1.msra.mxu0 0.0
    %595 = vmatprep.subr.mxu0 0.0
    %596 = vmatpush1.msra.mxu0 0.0
    %597 = vmatprep.subr.mxu0 0.0
    %598 = vmatpush1.msra.mxu0 0.0
    %599 = vmatprep.subr.mxu0 0.0
    %600 = vmatpush1.msra.mxu0 0.0
    %601 = vmatprep.subr.mxu0 0.0
    %602 = vmatpush1.msra.mxu0 0.0
    %603 = vmatprep.subr.mxu0 0.0
    %604 = vmatpush1.msra.mxu0 0.0
    %605 = vmatprep.subr.mxu0 0.0
    %606 = vmatpush1.msra.mxu0 0.0
    %607 = vmatprep.subr.mxu0 0.0
    %608 = vmatpush1.msra.mxu0 0.0
    %609 = vmatprep.subr.mxu0 0.0
    %610 = vmatpush1.msra.mxu0 0.0
    %611 = vmatprep.subr.mxu0 0.0
    %612 = vmatpush1.msra.mxu0 0.0
    %613 = vmatprep.subr.mxu0 0.0
    %614 = vmatpush1.msra.mxu0 0.0
    %615 = vmatprep.subr.mxu0 0.0
    %616 = vmatpush1.msra.mxu0 0.0
    %617 = vmatprep.subr.mxu0 0.0
    %618 = vmatpush1.msra.mxu0 0.0
    %619 = vmatprep.subr.mxu0 0.0
    %620 = vmatpush1.msra.mxu0 0.0
    %621 = vmatprep.subr.mxu0 0.0
    %622 = vmatpush1.msra.mxu0 0.0
    %623 = vmatprep.subr.mxu0 0.0
    %624 = vmatpush1.msra.mxu0 0.0
    %625 = vmatprep.subr.mxu0 0.0
    %626 = vmatpush1.msra.mxu0 0.0
    %627 = vmatprep.subr.mxu0 0.0
    %628 = vmatpush1.msra.mxu0 0.0
    %629 = vmatprep.subr.mxu0 0.0
    %630 = vmatpush1.msra.mxu0 0.0
    %631 = vmatprep.mubr.f32.mxu0 0.0
    %632 = vmatmul.mubr.f32.gmra.mrb[0].mxu0 %v565
    %v633 = vpop.f32.mrb[0].mxu0
    %v634 = vadd.f32 0.0, %v633
    %v635 = vpop.f32.mrb[0].mxu0
    %636 = vdwg.mxu0
    %v637 = vadd.f32 %v561, %v634
    %v638 = vxor.u32 %v637, 2147483648
    %v639 = vmul.f32 %v638, 1.442695
    %v640 = vpow.pop %v639
    %v641 = vadd.f32 %v640, 1.0
    %v642 = vrcp.pop %v641
    %v643 = vmul.f32 1.0, %v642
    %v644 = vadd.f32 %v634, %v330
    %646 = vrot.lane.b32.xlu0 %v644, 64
    %v647 = vpop.permute.xlu0 %646
    %v649 = vmul.f32 %v643, %v647
    %651 = vrot.lane.b32.xlu0 %v649, 64
    %v652 = vpop.permute.xlu0 %651
    %v654 = vadd.f32 %v561, %v652
    %v655 = vtanh.pop %v654
    %v656 = vsub.f32 1.0, %v643
    %658 = vrot.lane.b32.xlu0 %v655, 96
    %v659 = vpop.permute.xlu0 %658
    %v661 = vmul.f32 %v656, %v659
    %v662 = vmul.f32 %v643, %v559
    %v663 = vadd.f32 %v661, %v662
    %s664 = scalar_lea.vmem [#allocation2], 32
    %v665 = vld [vmem:[%s664] sm:$0xff]
    %667 = vrot.lane.b32.xlu0 %v663, 96
    %v668 = vpop.permute.xlu0 %667
    %v669 = vsel %vm248, %v668, 0
    %671 = vmatprep.subr.mxu0 0.0
    %672 = vmatpush1.msra.mxu0 %v237
    %673 = vmatprep.subr.mxu0 0.0
    %674 = vmatpush1.msra.mxu0 %v238
    %675 = vmatprep.subr.mxu0 0.0
    %676 = vmatpush1.msra.mxu0 %v239
    %677 = vmatprep.subr.mxu0 0.0
    %678 = vmatpush1.msra.mxu0 %v240
    %679 = vmatprep.subr.mxu0 0.0
    %680 = vmatpush1.msra.mxu0 0.0
    %681 = vmatprep.subr.mxu0 0.0
    %682 = vmatpush1.msra.mxu0 0.0
    %683 = vmatprep.subr.mxu0 0.0
    %684 = vmatpush1.msra.mxu0 0.0
    %685 = vmatprep.subr.mxu0 0.0
    %686 = vmatpush1.msra.mxu0 0.0
    %687 = vmatprep.subr.mxu0 0.0
    %688 = vmatpush1.msra.mxu0 0.0
    %689 = vmatprep.subr.mxu0 0.0
    %690 = vmatpush1.msra.mxu0 0.0
    %691 = vmatprep.subr.mxu0 0.0
    %692 = vmatpush1.msra.mxu0 0.0
    %693 = vmatprep.subr.mxu0 0.0
    %694 = vmatpush1.msra.mxu0 0.0
    %695 = vmatprep.subr.mxu0 0.0
    %696 = vmatpush1.msra.mxu0 0.0
    %697 = vmatprep.subr.mxu0 0.0
    %698 = vmatpush1.msra.mxu0 0.0
    %699 = vmatprep.subr.mxu0 0.0
    %700 = vmatpush1.msra.mxu0 0.0
    %701 = vmatprep.subr.mxu0 0.0
    %702 = vmatpush1.msra.mxu0 0.0
    %703 = vmatprep.subr.mxu0 0.0
    %704 = vmatpush1.msra.mxu0 0.0
    %705 = vmatprep.subr.mxu0 0.0
    %706 = vmatpush1.msra.mxu0 0.0
    %707 = vmatprep.subr.mxu0 0.0
    %708 = vmatpush1.msra.mxu0 0.0
    %709 = vmatprep.subr.mxu0 0.0
    %710 = vmatpush1.msra.mxu0 0.0
    %711 = vmatprep.subr.mxu0 0.0
    %712 = vmatpush1.msra.mxu0 0.0
    %713 = vmatprep.subr.mxu0 0.0
    %714 = vmatpush1.msra.mxu0 0.0
    %715 = vmatprep.subr.mxu0 0.0
    %716 = vmatpush1.msra.mxu0 0.0
    %717 = vmatprep.subr.mxu0 0.0
    %718 = vmatpush1.msra.mxu0 0.0
    %719 = vmatprep.subr.mxu0 0.0
    %720 = vmatpush1.msra.mxu0 0.0
    %721 = vmatprep.subr.mxu0 0.0
    %722 = vmatpush1.msra.mxu0 0.0
    %723 = vmatprep.subr.mxu0 0.0
    %724 = vmatpush1.msra.mxu0 0.0
    %725 = vmatprep.subr.mxu0 0.0
    %726 = vmatpush1.msra.mxu0 0.0
    %727 = vmatprep.subr.mxu0 0.0
    %728 = vmatpush1.msra.mxu0 0.0
    %729 = vmatprep.subr.mxu0 0.0
    %730 = vmatpush1.msra.mxu0 0.0
    %731 = vmatprep.subr.mxu0 0.0
    %732 = vmatpush1.msra.mxu0 0.0
    %733 = vmatprep.subr.mxu0 0.0
    %734 = vmatpush1.msra.mxu0 0.0
    %735 = vmatprep.mubr.f32.mxu0 0.0
    %736 = vmatmul.mubr.f32.gmra.mrb[0].mxu0 %v669
    %v737 = vpop.f32.mrb[0].mxu0
    %v738 = vadd.f32 0.0, %v737
    %v739 = vpop.f32.mrb[0].mxu0
    %740 = vdwg.mxu0
    %v741 = vadd.f32 %v665, %v738
    %v742 = vxor.u32 %v741, 2147483648
    %v743 = vmul.f32 %v742, 1.442695
    %v744 = vpow.pop %v743
    %v745 = vadd.f32 %v744, 1.0
    %v746 = vrcp.pop %v745
    %v747 = vmul.f32 1.0, %v746
    %v748 = vadd.f32 %v738, %v330
    %750 = vrot.lane.b32.xlu0 %v748, 64
    %v751 = vpop.permute.xlu0 %750
    %v753 = vmul.f32 %v747, %v751
    %755 = vrot.lane.b32.xlu0 %v753, 64
    %v756 = vpop.permute.xlu0 %755
    %v758 = vadd.f32 %v665, %v756
    %v759 = vtanh.pop %v758
    %v760 = vsub.f32 1.0, %v747
    %762 = vrot.lane.b32.xlu0 %v759, 96
    %v763 = vpop.permute.xlu0 %762
    %v765 = vmul.f32 %v760, %v763
    %v766 = vmul.f32 %v747, %v663
    %v767 = vadd.f32 %v765, %v766
    %s768 = scalar_lea.vmem [#allocation2], 40
    %v769 = vld [vmem:[%s768] sm:$0xff]
    %771 = vrot.lane.b32.xlu0 %v767, 96
    %v772 = vpop.permute.xlu0 %771
    %v773 = vsel %vm248, %v772, 0
    %775 = vmatprep.subr.mxu0 0.0
    %776 = vmatpush1.msra.mxu0 %v237
    %777 = vmatprep.subr.mxu0 0.0
    %778 = vmatpush1.msra.mxu0 %v238
    %779 = vmatprep.subr.mxu0 0.0
    %780 = vmatpush1.msra.mxu0 %v239
    %781 = vmatprep.subr.mxu0 0.0
    %782 = vmatpush1.msra.mxu0 %v240
    %783 = vmatprep.subr.mxu0 0.0
    %784 = vmatpush1.msra.mxu0 0.0
    %785 = vmatprep.subr.mxu0 0.0
    %786 = vmatpush1.msra.mxu0 0.0
    %787 = vmatprep.subr.mxu0 0.0
    %788 = vmatpush1.msra.mxu0 0.0
    %789 = vmatprep.subr.mxu0 0.0
    %790 = vmatpush1.msra.mxu0 0.0
    %791 = vmatprep.subr.mxu0 0.0
    %792 = vmatpush1.msra.mxu0 0.0
    %793 = vmatprep.subr.mxu0 0.0
    %794 = vmatpush1.msra.mxu0 0.0
    %795 = vmatprep.subr.mxu0 0.0
    %796 = vmatpush1.msra.mxu0 0.0
    %797 = vmatprep.subr.mxu0 0.0
    %798 = vmatpush1.msra.mxu0 0.0
    %799 = vmatprep.subr.mxu0 0.0
    %800 = vmatpush1.msra.mxu0 0.0
    %801 = vmatprep.subr.mxu0 0.0
    %802 = vmatpush1.msra.mxu0 0.0
    %803 = vmatprep.subr.mxu0 0.0
    %804 = vmatpush1.msra.mxu0 0.0
    %805 = vmatprep.subr.mxu0 0.0
    %806 = vmatpush1.msra.mxu0 0.0
    %807 = vmatprep.subr.mxu0 0.0
    %808 = vmatpush1.msra.mxu0 0.0
    %809 = vmatprep.subr.mxu0 0.0
    %810 = vmatpush1.msra.mxu0 0.0
    %811 = vmatprep.subr.mxu0 0.0
    %812 = vmatpush1.msra.mxu0 0.0
    %813 = vmatprep.subr.mxu0 0.0
    %814 = vmatpush1.msra.mxu0 0.0
    %815 = vmatprep.subr.mxu0 0.0
    %816 = vmatpush1.msra.mxu0 0.0
    %817 = vmatprep.subr.mxu0 0.0
    %818 = vmatpush1.msra.mxu0 0.0
    %819 = vmatprep.subr.mxu0 0.0
    %820 = vmatpush1.msra.mxu0 0.0
    %821 = vmatprep.subr.mxu0 0.0
    %822 = vmatpush1.msra.mxu0 0.0
    %823 = vmatprep.subr.mxu0 0.0
    %824 = vmatpush1.msra.mxu0 0.0
    %825 = vmatprep.subr.mxu0 0.0
    %826 = vmatpush1.msra.mxu0 0.0
    %827 = vmatprep.subr.mxu0 0.0
    %828 = vmatpush1.msra.mxu0 0.0
    %829 = vmatprep.subr.mxu0 0.0
    %830 = vmatpush1.msra.mxu0 0.0
    %831 = vmatprep.subr.mxu0 0.0
    %832 = vmatpush1.msra.mxu0 0.0
    %833 = vmatprep.subr.mxu0 0.0
    %834 = vmatpush1.msra.mxu0 0.0
    %835 = vmatprep.subr.mxu0 0.0
    %836 = vmatpush1.msra.mxu0 0.0
    %837 = vmatprep.subr.mxu0 0.0
    %838 = vmatpush1.msra.mxu0 0.0
    %839 = vmatprep.mubr.f32.mxu0 0.0
    %840 = vmatmul.mubr.f32.gmra.mrb[0].mxu0 %v773
    %v841 = vpop.f32.mrb[0].mxu0
    %v842 = vadd.f32 0.0, %v841
    %v843 = vpop.f32.mrb[0].mxu0
    %844 = vdwg.mxu0
    %v845 = vadd.f32 %v769, %v842
    %v846 = vxor.u32 %v845, 2147483648
    %v847 = vmul.f32 %v846, 1.442695
    %v848 = vpow.pop %v847
    %v849 = vadd.f32 %v848, 1.0
    %v850 = vrcp.pop %v849
    %v851 = vmul.f32 1.0, %v850
    %v852 = vadd.f32 %v842, %v330
    %854 = vrot.lane.b32.xlu0 %v852, 64
    %v855 = vpop.permute.xlu0 %854
    %v857 = vmul.f32 %v851, %v855
    %859 = vrot.lane.b32.xlu0 %v857, 64
    %v860 = vpop.permute.xlu0 %859
    %v862 = vadd.f32 %v769, %v860
    %v863 = vtanh.pop %v862
    %v864 = vsub.f32 1.0, %v851
    %866 = vrot.lane.b32.xlu0 %v863, 96
    %v867 = vpop.permute.xlu0 %866
    %v869 = vmul.f32 %v864, %v867
    %v870 = vmul.f32 %v851, %v767
    %v871 = vadd.f32 %v869, %v870
    %s872 = scalar_lea.vmem [#allocation2], 48
    %v873 = vld [vmem:[%s872] sm:$0xff]
    %875 = vrot.lane.b32.xlu0 %v871, 96
    %v876 = vpop.permute.xlu0 %875
    %v877 = vsel %vm248, %v876, 0
    %879 = vmatprep.subr.mxu0 0.0
    %880 = vmatpush1.msra.mxu0 %v237
    %881 = vmatprep.subr.mxu0 0.0
    %882 = vmatpush1.msra.mxu0 %v238
    %883 = vmatprep.subr.mxu0 0.0
    %884 = vmatpush1.msra.mxu0 %v239
    %885 = vmatprep.subr.mxu0 0.0
    %886 = vmatpush1.msra.mxu0 %v240
    %887 = vmatprep.subr.mxu0 0.0
    %888 = vmatpush1.msra.mxu0 0.0
    %889 = vmatprep.subr.mxu0 0.0
    %890 = vmatpush1.msra.mxu0 0.0
    %891 = vmatprep.subr.mxu0 0.0
    %892 = vmatpush1.msra.mxu0 0.0
    %893 = vmatprep.subr.mxu0 0.0
    %894 = vmatpush1.msra.mxu0 0.0
    %895 = vmatprep.subr.mxu0 0.0
    %896 = vmatpush1.msra.mxu0 0.0
    %897 = vmatprep.subr.mxu0 0.0
    %898 = vmatpush1.msra.mxu0 0.0
    %899 = vmatprep.subr.mxu0 0.0
    %900 = vmatpush1.msra.mxu0 0.0
    %901 = vmatprep.subr.mxu0 0.0
    %902 = vmatpush1.msra.mxu0 0.0
    %903 = vmatprep.subr.mxu0 0.0
    %904 = vmatpush1.msra.mxu0 0.0
    %905 = vmatprep.subr.mxu0 0.0
    %906 = vmatpush1.msra.mxu0 0.0
    %907 = vmatprep.subr.mxu0 0.0
    %908 = vmatpush1.msra.mxu0 0.0
    %909 = vmatprep.subr.mxu0 0.0
    %910 = vmatpush1.msra.mxu0 0.0
    %911 = vmatprep.subr.mxu0 0.0
    %912 = vmatpush1.msra.mxu0 0.0
    %913 = vmatprep.subr.mxu0 0.0
    %914 = vmatpush1.msra.mxu0 0.0
    %915 = vmatprep.subr.mxu0 0.0
    %916 = vmatpush1.msra.mxu0 0.0
    %917 = vmatprep.subr.mxu0 0.0
    %918 = vmatpush1.msra.mxu0 0.0
    %919 = vmatprep.subr.mxu0 0.0
    %920 = vmatpush1.msra.mxu0 0.0
    %921 = vmatprep.subr.mxu0 0.0
    %922 = vmatpush1.msra.mxu0 0.0
    %923 = vmatprep.subr.mxu0 0.0
    %924 = vmatpush1.msra.mxu0 0.0
    %925 = vmatprep.subr.mxu0 0.0
    %926 = vmatpush1.msra.mxu0 0.0
    %927 = vmatprep.subr.mxu0 0.0
    %928 = vmatpush1.msra.mxu0 0.0
    %929 = vmatprep.subr.mxu0 0.0
    %930 = vmatpush1.msra.mxu0 0.0
    %931 = vmatprep.subr.mxu0 0.0
    %932 = vmatpush1.msra.mxu0 0.0
    %933 = vmatprep.subr.mxu0 0.0
    %934 = vmatpush1.msra.mxu0 0.0
    %935 = vmatprep.subr.mxu0 0.0
    %936 = vmatpush1.msra.mxu0 0.0
    %937 = vmatprep.subr.mxu0 0.0
    %938 = vmatpush1.msra.mxu0 0.0
    %939 = vmatprep.subr.mxu0 0.0
    %940 = vmatpush1.msra.mxu0 0.0
    %941 = vmatprep.subr.mxu0 0.0
    %942 = vmatpush1.msra.mxu0 0.0
    %943 = vmatprep.mubr.f32.mxu0 0.0
    %944 = vmatmul.mubr.f32.gmra.mrb[0].mxu0 %v877
    %v945 = vpop.f32.mrb[0].mxu0
    %v946 = vadd.f32 0.0, %v945
    %v947 = vpop.f32.mrb[0].mxu0
    %948 = vdwg.mxu0
    %v949 = vadd.f32 %v873, %v946
    %v950 = vxor.u32 %v949, 2147483648
    %v951 = vmul.f32 %v950, 1.442695
    %v952 = vpow.pop %v951
    %v953 = vadd.f32 %v952, 1.0
    %v954 = vrcp.pop %v953
    %v955 = vmul.f32 1.0, %v954
    %v956 = vadd.f32 %v946, %v330
    %958 = vrot.lane.b32.xlu0 %v956, 64
    %v959 = vpop.permute.xlu0 %958
    %v961 = vmul.f32 %v955, %v959
    %963 = vrot.lane.b32.xlu0 %v961, 64
    %v964 = vpop.permute.xlu0 %963
    %v966 = vadd.f32 %v873, %v964
    %v967 = vtanh.pop %v966
    %v968 = vsub.f32 1.0, %v955
    %970 = vrot.lane.b32.xlu0 %v967, 96
    %v971 = vpop.permute.xlu0 %970
    %v973 = vmul.f32 %v968, %v971
    %v974 = vmul.f32 %v955, %v871
    %v975 = vadd.f32 %v973, %v974
    %s976 = scalar_lea.vmem [#allocation2], 56
    %v977 = vld [vmem:[%s976] sm:$0xff]
    %979 = vrot.lane.b32.xlu0 %v975, 96
    %v980 = vpop.permute.xlu0 %979
    %v981 = vsel %vm248, %v980, 0
    %983 = vmatprep.subr.mxu0 0.0
    %984 = vmatpush1.msra.mxu0 %v237
    %985 = vmatprep.subr.mxu0 0.0
    %986 = vmatpush1.msra.mxu0 %v238
    %987 = vmatprep.subr.mxu0 0.0
    %988 = vmatpush1.msra.mxu0 %v239
    %989 = vmatprep.subr.mxu0 0.0
    %990 = vmatpush1.msra.mxu0 %v240
    %991 = vmatprep.subr.mxu0 0.0
    %992 = vmatpush1.msra.mxu0 0.0
    %993 = vmatprep.subr.mxu0 0.0
    %994 = vmatpush1.msra.mxu0 0.0
    %995 = vmatprep.subr.mxu0 0.0
    %996 = vmatpush1.msra.mxu0 0.0
    %997 = vmatprep.subr.mxu0 0.0
    %998 = vmatpush1.msra.mxu0 0.0
    %999 = vmatprep.subr.mxu0 0.0
    %1000 = vmatpush1.msra.mxu0 0.0
    %1001 = vmatprep.subr.mxu0 0.0
    %1002 = vmatpush1.msra.mxu0 0.0
    %1003 = vmatprep.subr.mxu0 0.0
    %1004 = vmatpush1.msra.mxu0 0.0
    %1005 = vmatprep.subr.mxu0 0.0
    %1006 = vmatpush1.msra.mxu0 0.0
    %1007 = vmatprep.subr.mxu0 0.0
    %1008 = vmatpush1.msra.mxu0 0.0
    %1009 = vmatprep.subr.mxu0 0.0
    %1010 = vmatpush1.msra.mxu0 0.0
    %1011 = vmatprep.subr.mxu0 0.0
    %1012 = vmatpush1.msra.mxu0 0.0
    %1013 = vmatprep.subr.mxu0 0.0
    %1014 = vmatpush1.msra.mxu0 0.0
    %1015 = vmatprep.subr.mxu0 0.0
    %1016 = vmatpush1.msra.mxu0 0.0
    %1017 = vmatprep.subr.mxu0 0.0
    %1018 = vmatpush1.msra.mxu0 0.0
    %1019 = vmatprep.subr.mxu0 0.0
    %1020 = vmatpush1.msra.mxu0 0.0
    %1021 = vmatprep.subr.mxu0 0.0
    %1022 = vmatpush1.msra.mxu0 0.0
    %1023 = vmatprep.subr.mxu0 0.0
    %1024 = vmatpush1.msra.mxu0 0.0
    %1025 = vmatprep.subr.mxu0 0.0
    %1026 = vmatpush1.msra.mxu0 0.0
    %1027 = vmatprep.subr.mxu0 0.0
    %1028 = vmatpush1.msra.mxu0 0.0
    %1029 = vmatprep.subr.mxu0 0.0
    %1030 = vmatpush1.msra.mxu0 0.0
    %1031 = vmatprep.subr.mxu0 0.0
    %1032 = vmatpush1.msra.mxu0 0.0
    %1033 = vmatprep.subr.mxu0 0.0
    %1034 = vmatpush1.msra.mxu0 0.0
    %1035 = vmatprep.subr.mxu0 0.0
    %1036 = vmatpush1.msra.mxu0 0.0
    %1037 = vmatprep.subr.mxu0 0.0
    %1038 = vmatpush1.msra.mxu0 0.0
    %1039 = vmatprep.subr.mxu0 0.0
    %1040 = vmatpush1.msra.mxu0 0.0
    %1041 = vmatprep.subr.mxu0 0.0
    %1042 = vmatpush1.msra.mxu0 0.0
    %1043 = vmatprep.subr.mxu0 0.0
    %1044 = vmatpush1.msra.mxu0 0.0
    %1045 = vmatprep.subr.mxu0 0.0
    %1046 = vmatpush1.msra.mxu0 0.0
    %1047 = vmatprep.mubr.f32.mxu0 0.0
    %1048 = vmatmul.mubr.f32.gmra.mrb[0].mxu0 %v981
    %v1049 = vpop.f32.mrb[0].mxu0
    %v1050 = vadd.f32 0.0, %v1049
    %v1051 = vpop.f32.mrb[0].mxu0
    %1052 = vdwg.mxu0
    %v1053 = vadd.f32 %v977, %v1050
    %v1054 = vxor.u32 %v1053, 2147483648
    %v1055 = vmul.f32 %v1054, 1.442695
    %v1056 = vpow.pop %v1055
    %v1057 = vadd.f32 %v1056, 1.0
    %v1058 = vrcp.pop %v1057
    %v1059 = vmul.f32 1.0, %v1058
    %v1060 = vadd.f32 %v1050, %v330
    %1062 = vrot.lane.b32.xlu0 %v1060, 64
    %v1063 = vpop.permute.xlu0 %1062
    %v1065 = vmul.f32 %v1059, %v1063
    %1067 = vrot.lane.b32.xlu0 %v1065, 64
    %v1068 = vpop.permute.xlu0 %1067
    %v1070 = vadd.f32 %v977, %v1068
    %v1071 = vtanh.pop %v1070
    %v1072 = vsub.f32 1.0, %v1059
    %1074 = vrot.lane.b32.xlu0 %v1071, 96
    %v1075 = vpop.permute.xlu0 %1074
    %v1077 = vmul.f32 %v1072, %v1075
    %v1078 = vmul.f32 %v1059, %v975
    %v1079 = vadd.f32 %v1077, %v1078
    %v1080 = vld [vmem:[%s4] sm:$0xff]
    %v1081 = vld [vmem:[%s4 + $0x8] sm:$0xff]
    %v1082 = vld [vmem:[%s4 + $0x10] sm:$0xff]
    %v1083 = vld [vmem:[%s4 + $0x18] sm:$0xff]
    %v1084 = vld [vmem:[%s5] sm:$0x1]
    %v1086 = vlaneseq
    %v1087 = vshrl.u32 %v1086, 7
    %v1088 = vsub.s32 0, %v1087
    %v1089 = vrot.slane %v1084, %v1088
    %1092 = vrot.lane.b32.xlu0 %v1079, 96
    %v1093 = vpop.permute.xlu0 %1092
    %v1094 = vsel %vm248, %v1093, 0
    %1096 = vmatprep.subr.mxu0 0.0
    %1097 = vmatpush1.msra.mxu0 %v1080
    %1098 = vmatprep.subr.mxu0 0.0
    %1099 = vmatpush1.msra.mxu0 %v1081
    %1100 = vmatprep.subr.mxu0 0.0
    %1101 = vmatpush1.msra.mxu0 %v1082
    %1102 = vmatprep.subr.mxu0 0.0
    %1103 = vmatpush1.msra.mxu0 %v1083
    %1104 = vmatprep.subr.mxu0 0.0
    %1105 = vmatpush1.msra.mxu0 0.0
    %1106 = vmatprep.subr.mxu0 0.0
    %1107 = vmatpush1.msra.mxu0 0.0
    %1108 = vmatprep.subr.mxu0 0.0
    %1109 = vmatpush1.msra.mxu0 0.0
    %1110 = vmatprep.subr.mxu0 0.0
    %1111 = vmatpush1.msra.mxu0 0.0
    %1112 = vmatprep.subr.mxu0 0.0
    %1113 = vmatpush1.msra.mxu0 0.0
    %1114 = vmatprep.subr.mxu0 0.0
    %1115 = vmatpush1.msra.mxu0 0.0
    %1116 = vmatprep.subr.mxu0 0.0
    %1117 = vmatpush1.msra.mxu0 0.0
    %1118 = vmatprep.subr.mxu0 0.0
    %1119 = vmatpush1.msra.mxu0 0.0
    %1120 = vmatprep.subr.mxu0 0.0
    %1121 = vmatpush1.msra.mxu0 0.0
    %1122 = vmatprep.subr.mxu0 0.0
    %1123 = vmatpush1.msra.mxu0 0.0
    %1124 = vmatprep.subr.mxu0 0.0
    %1125 = vmatpush1.msra.mxu0 0.0
    %1126 = vmatprep.subr.mxu0 0.0
    %1127 = vmatpush1.msra.mxu0 0.0
    %1128 = vmatprep.subr.mxu0 0.0
    %1129 = vmatpush1.msra.mxu0 0.0
    %1130 = vmatprep.subr.mxu0 0.0
    %1131 = vmatpush1.msra.mxu0 0.0
    %1132 = vmatprep.subr.mxu0 0.0
    %1133 = vmatpush1.msra.mxu0 0.0
    %1134 = vmatprep.subr.mxu0 0.0
    %1135 = vmatpush1.msra.mxu0 0.0
    %1136 = vmatprep.subr.mxu0 0.0
    %1137 = vmatpush1.msra.mxu0 0.0
    %1138 = vmatprep.subr.mxu0 0.0
    %1139 = vmatpush1.msra.mxu0 0.0
    %1140 = vmatprep.subr.mxu0 0.0
    %1141 = vmatpush1.msra.mxu0 0.0
    %1142 = vmatprep.subr.mxu0 0.0
    %1143 = vmatpush1.msra.mxu0 0.0
    %1144 = vmatprep.subr.mxu0 0.0
    %1145 = vmatpush1.msra.mxu0 0.0
    %1146 = vmatprep.subr.mxu0 0.0
    %1147 = vmatpush1.msra.mxu0 0.0
    %1148 = vmatprep.subr.mxu0 0.0
    %1149 = vmatpush1.msra.mxu0 0.0
    %1150 = vmatprep.subr.mxu0 0.0
    %1151 = vmatpush1.msra.mxu0 0.0
    %1152 = vmatprep.subr.mxu0 0.0
    %1153 = vmatpush1.msra.mxu0 0.0
    %1154 = vmatprep.subr.mxu0 0.0
    %1155 = vmatpush1.msra.mxu0 0.0
    %1156 = vmatprep.subr.mxu0 0.0
    %1157 = vmatpush1.msra.mxu0 0.0
    %1158 = vmatprep.subr.mxu0 0.0
    %1159 = vmatpush1.msra.mxu0 0.0
    %1160 = vmatprep.mubr.f32.mxu0 0.0
    %1161 = vmatmul.mubr.f32.gmra.mrb[0].mxu0 %v1094
    %v1162 = vpop.f32.mrb[0].mxu0
    %v1163 = vadd.f32 %v1089, %v1162
    %v1164 = vpop.f32.mrb[0].mxu0
    %1165 = vdwg.mxu0
    %1166 = vst [vmem:[#allocation6] sm:$0xff] %v1163
    // Predicated region
    $region30: #{tpu_custom_call.1} parent=1 // pred_check
      _
    $region31: #{tpu_custom_call.1} parent=1 // pred_check_branch
      %1168 = sbr.rel (0) target = $region33
    $region32: #{tpu_custom_call.1} parent=1 // pred_region
      %s1170 = ssub.s32 128, 128
      %1171 = vsyncadd [#allocation5], %s1170
      %s1173 = sshll.u32 [#allocation6], 4
      %s1174 = int_to_ptr.vmem [resolvable:$true] %s1173
      %1176 = dma.vmem_to_hbm [thread:$0]  %s1174, 128, %s6, [#allocation5]
    $region33: #{tpu_custom_call.1} parent=1 // pred_fallthru
      _
    // Predicated region
    $region34: #{tpu_custom_call.1} parent=1 // pred_check
      _
    $region35: #{tpu_custom_call.1} parent=1 // pred_check_branch
      %1178 = sbr.rel (0) target = $region37
    $region36: #{tpu_custom_call.1} parent=1 // pred_region
      %1179 = dma.done [#allocation5], 128
    $region37: #{tpu_custom_call.1} parent=1 // pred_fallthru
      _
    %1180 = vsyncpa [#allocation4], 1
    %1181 = vsyncpa [#allocation5], 1

</llo_original>
